<compile_context>
chip_gen: v6e
topology: v6e:2x2x1
jax: 0.10.0
libtpu: 0.0.40
codegen_flags: <defaults>
</compile_context>

<pallas_src>
import jax
import jax.numpy as jnp
from jax.experimental import pallas as pl
from jax.experimental.pallas import tpu as pltpu

N_LAYERS = 3
F32 = jnp.float32


# ----------------------------- kernels ---------------------------------------


def gnn_core_kernel(xT_ref, atnT_ref, neWT_ref, nebT_ref, gWT_ref, gbT_ref,
                    e_o1WT_ref, n_o1WT_ref, n_o1bT_ref, n_o2w_ref, n_o2b_ref,
                    zT_ref, node_row_ref):
    """Fused (edge|node) GNN stack + node head + edge pre-gather linear (transposed)."""
    D = e_o1WT_ref.shape[0]
    n_layers = gWT_ref.shape[0]
    prop_dt = atnT_ref.dtype                       # bf16 fast path / f32 reference path
    ATnT = atnT_ref[...]                           # (N, N): D_out^-1/2 A D_in^-1/2

    # Fused node embedding for both branches: h^T has shape (2D, N).  K=4 -> keep f32.
    h = jnp.dot(neWT_ref[...], xT_ref[...], preferred_element_type=F32) + nebT_ref[...]

    # n_layers x [GraphConv('both') -> ReLU]; one propagation matmul covers both branches.
    # Matmul inputs in prop_dt (bf16 by default), accumulation stays f32.
    for l in range(n_layers):
        agg = jnp.dot(h.astype(prop_dt), ATnT, preferred_element_type=F32)        # (2D, N)
        h = jnp.maximum(
            jnp.dot(gWT_ref[l], agg.astype(gWT_ref.dtype),
                    preferred_element_type=F32) + gbT_ref[l], 0.0)

    h_eT = h[:D, :]                                # edge-branch node features (D, N)
    h_nT = h[D:, :]                                # node-branch node features (D, N)

    # Edge head, part 1 (pre-gather linear): z = h_e @ W1 computed once per node.
    zT_ref[...] = jnp.dot(e_o1WT_ref[...], h_eT, preferred_element_type=F32)      # (D, N)

    # Node head: Linear -> ReLU -> Linear(D->1) as VPU mul + sublane reduce (lane-dense).
    nh1 = jnp.maximum(
        jnp.dot(n_o1WT_ref[...], h_nT, preferred_element_type=F32) + n_o1bT_ref[...], 0.0)
    node_row_ref[...] = (jnp.sum(nh1 * n_o2w_ref[...], axis=0, keepdims=True)
                         + n_o2b_ref[...])         # (1, N)


def edge_head_kernel(ehT_ref, o1b_ref, o2w_ref, o2b_ref, out_ref):
    """Per lane-dense edge tile: bias + ReLU + D->1 projection (VPU mul + sublane reduce)."""
    eh1 = jnp.maximum(ehT_ref[...] + o1b_ref[...], 0.0)                  # (D, TILE_E)
    out_ref[...] = (jnp.sum(eh1 * o2w_ref[...], axis=0, keepdims=True)
                    + o2b_ref[...])                                      # (1, TILE_E)


# ----------------------------- host-side helpers ------------------------------


def _round_up(x, m):
    return ((x + m - 1) // m) * m


def _tpu_vmem_capacity_bytes():
    try:
        return int(pltpu.get_tpu_info().vmem_capacity_bytes)
    except Exception:
        return 64 * 1024 * 1024   # conservative fallback (v7x per-core VMEM)


def _vmem_limit_bytes(need_bytes):
    """Generation-aware VMEM limit: requested bytes + headroom, capped at 90% of physical."""
    cap = _tpu_vmem_capacity_bytes()
    want = int(need_bytes * 1.3) + (4 << 20)
    return int(max(16 << 20, min(want, int(cap * 0.9))))


def init_params(key, embed_dim, n_layers=N_LAYERS):
    """Deterministic synthetic parameters (shapes follow the nn.Module __init__).
    The dead edge_embedding Linear is intentionally omitted (overwritten by apply_edges)."""
    ks = iter(jax.random.split(key, 64))

    def lin(fan_in, fan_out):
        s = 1.0 / jnp.sqrt(jnp.asarray(fan_in, F32))
        w = jax.random.uniform(next(ks), (fan_in, fan_out), F32, -s, s)
        b = jax.random.uniform(next(ks), (1, fan_out), F32, -s, s)
        return w, b

    def branch():
        neW, neb = lin(4, embed_dim)                                              # node_embedding
        gW = jnp.stack([lin(embed_dim, embed_dim)[0] for _ in range(n_layers)])   # (L, D, D)
        gb = jnp.stack([lin(embed_dim, embed_dim)[1] for _ in range(n_layers)])   # (L, 1, D)
        o1W, o1b = lin(embed_dim, embed_dim)                                      # output[0]
        o2W, o2b = lin(embed_dim, 1)                                              # output[2]
        return (neW, neb, gW, gb, o1W, o1b, o2W, o2b)

    return branch(), branch()       # (edge_model params, node_model params)


def tspdl_rl_forward(node_feats, edge_feats, src, dst, params, *,
                     tile_e=None, prop_dtype=jnp.bfloat16):
    """TSPDLRLModel.forward: returns (edge_preds (E,1), node_preds (N,1))."""
    del edge_feats  # edge_embedding output is overwritten by apply_edges -> dead in forward.

    (e_neW, e_neb, e_gW, e_gb, e_o1W, e_o1b, e_o2W, e_o2b) = params[0]
    (n_neW, n_neb, n_gW, n_gb, n_o1W, n_o1b, n_o2W, n_o2b) = params[1]

    N = node_feats.shape[0]
    E = src.shape[0]
    D = e_neW.shape[1]
    n_layers = e_gW.shape[0]
    src = src.astype(jnp.int32)
    dst = dst.astype(jnp.int32)

    # Dense message operator with DGL's symmetric normalization folded in once, built
    # directly in the transposed orientation the kernel wants (no (N,N) XLA transpose):
    #   ATnT = D_out^-1/2 A D_in^-1/2, A[u,v] = #edges u->v, degrees clamped to >= 1.
    A = jnp.zeros((N, N), F32).at[src, dst].add(1.0)
    inv_sqrt_out = jax.lax.rsqrt(jnp.maximum(jnp.sum(A, axis=1), 1.0))    # per source u
    inv_sqrt_in = jax.lax.rsqrt(jnp.maximum(jnp.sum(A, axis=0), 1.0))     # per destination v
    ATnT = (inv_sqrt_out[:, None] * A * inv_sqrt_in[None, :]).astype(prop_dtype)

    # Fused (edge | node) transposed weights: features on sublanes, nodes on lanes.
    W_neT = jnp.concatenate([e_neW.T, n_neW.T], axis=0)                   # (2D, 4)
    b_neT = jnp.concatenate([e_neb.T, n_neb.T], axis=0)                   # (2D, 1)
    zblk = jnp.zeros((D, D), F32)
    W_gT = jnp.stack([jnp.block([[e_gW[l].T, zblk], [zblk, n_gW[l].T]])
                      for l in range(n_layers)]).astype(prop_dtype)       # (L, 2D, 2D)
    b_gT = jnp.stack([jnp.concatenate([e_gb[l].T, n_gb[l].T], axis=0)
                      for l in range(n_layers)])                          # (L, 2D, 1)

    xT = node_feats.astype(F32).T                                         # (4, N)

    vmem = pl.BlockSpec(memory_space=pltpu.MemorySpace.VMEM)
    core_inputs = (xT, ATnT, W_neT, b_neT, W_gT, b_gT,
                   e_o1W.T, n_o1W.T, n_o1b.T, n_o2W, n_o2b)
    # In-kernel temporaries: h/agg (2D,N) f32, their prop_dtype casts, nh1 (D,N) f32.
    prop_bytes = jnp.dtype(prop_dtype).itemsize
    core_tmp_bytes = 2 * (2 * D * N * 4) + 2 * (2 * D * N * prop_bytes) + D * N * 4
    core_out_bytes = D * N * 4 + N * 4
    core_in_bytes = sum(int(a.size) * a.dtype.itemsize for a in core_inputs)

    # TODO(synk): when ATnT stops fitting in VMEM (N >~ 5000 in bf16 on v7x's 64 MiB),
    # switch to a (L, N/TILE_N) grid that keeps h in VMEM scratch and streams ATnT lane
    # blocks (pltpu.emit_pipeline); the resident path is kept since typical TSPDL sizes fit.
    # TODO(synk): on v7x, de-fuse the edge/node branches into a size-2 "parallel" grid axis
    # so both TensorCores each run a (D,N) stack; kept fused (2D rows) for v5e/v6e MXU fill.
    zT, node_row = pl.pallas_call(
        gnn_core_kernel,
        out_shape=(jax.ShapeDtypeStruct((D, N), F32),    # z^T = (h_e @ e_o1W)^T
                   jax.ShapeDtypeStruct((1, N), F32)),   # node_preds row (lane-dense)
        in_specs=[vmem] * len(core_inputs),
        out_specs=(vmem, vmem),
        compiler_params=pltpu.CompilerParams(
            vmem_limit_bytes=_vmem_limit_bytes(
                core_in_bytes + core_out_bytes + core_tmp_bytes)),
    )(*core_inputs)

    # ---- edge gather: plain XLA column gather between the two pallas_calls (review-
    # preferred).  z[src] + z[dst] replaces the old O(D*N*E) in-kernel mask-matmul and
    # removes the (N, TILE_E) sel temporary entirely. ----
    edge_hT = jnp.take(zT, src, axis=1) + jnp.take(zT, dst, axis=1)       # (D, E)

    if tile_e is None:
        # No big per-tile temporaries remain, so large lane-dense tiles are cheap on all
        # generations (fewer grid steps, longer unmasked stores).
        tile_e = min(2048, _round_up(max(E, 1), 128))
    E_pad = _round_up(max(E, 1), tile_e)
    edge_hT = jnp.pad(edge_hT.astype(F32), ((0, 0), (0, E_pad - E)))

    # Per-step VMEM: double-buffered (D,TILE_E) in + (1,TILE_E) out blocks, tiny residents,
    # one (D,TILE_E) temporary.
    eh_bytes = (2 * (D * tile_e * 4) + 2 * (tile_e * 4)
                + (2 * D + 1) * 4 + D * tile_e * 4)

    edge_row = pl.pallas_call(
        edge_head_kernel,
        out_shape=jax.ShapeDtypeStruct((1, E_pad), F32),
        grid=(E_pad // tile_e,),
        in_specs=[
            pl.BlockSpec((D, tile_e), lambda i: (0, i)),   # gathered edge features tile
            vmem,                                          # e_o1b^T (D,1), resident
            vmem,                                          # e_o2W   (D,1), resident
            vmem,                                          # e_o2b   (1,1), resident
        ],
        out_specs=pl.BlockSpec((1, tile_e), lambda i: (0, i)),
        compiler_params=pltpu.CompilerParams(
            dimension_semantics=("parallel",),
            vmem_limit_bytes=_vmem_limit_bytes(eh_bytes)),
    )(edge_hT, e_o1b.T, e_o2W, e_o2b)

    edge_preds = edge_row[0, :E].reshape(E, 1)
    node_preds = node_row.reshape(N, 1)
    return edge_preds, node_preds


def _reference_forward(node_feats, src, dst, params):
    """Pure-JAX (f32) mirror of the PyTorch/DGL forward, for correctness checking."""
    N = node_feats.shape[0]
    AT = jnp.zeros((N, N), F32).at[dst, src].add(1.0)
    norm_out = jax.lax.rsqrt(jnp.maximum(jnp.sum(AT, axis=0), 1.0))[:, None]
    norm_in = jax.lax.rsqrt(jnp.maximum(jnp.sum(AT, axis=1), 1.0))[:, None]

    def branch(p):
        neW, neb, gW, gb, o1W, o1b, o2W, o2b = p
        h = node_feats @ neW + neb
        for l in range(gW.shape[0]):
            agg = (AT @ (h * norm_out)) * norm_in
            h = jax.nn.relu(agg @ gW[l] + gb[l])
        return h, (o1W, o1b, o2W, o2b)

    h_e, (eo1W, eo1b, eo2W, eo2b) = branch(params[0])
    h_n, (no1W, no1b, no2W, no2b) = branch(params[1])
    edge_h = h_e[src] + h_e[dst]
    edge_preds = jax.nn.relu(edge_h @ eo1W + eo1b) @ eo2W + eo2b
    node_preds = jax.nn.relu(h_n @ no1W + no1b) @ no2W + no2b
    return edge_preds, node_preds


# ----------------------------- demo -------------------------------------------


if __name__ == "__main__":
    key = jax.random.PRNGKey(0)
    k_params, k_nodes, k_edges = jax.random.split(key, 3)

    N = 8            # nodes
    in_dim = 4       # edge feature dim (edge_embedding input; dead in the forward)
    embed_dim = 32

    # Complete directed graph without self-loops (every node has in-degree >= 1,
    # matching DGL GraphConv's allow_zero_in_degree=False requirement).
    src_list, dst_list = [], []
    for i in range(N):
        for j in range(N):
            if i != j:
                src_list.append(i)
                dst_list.append(j)
    src = jnp.asarray(src_list, jnp.int32)
    dst = jnp.asarray(dst_list, jnp.int32)
    E = src.shape[0]

    node_feats = jax.random.normal(k_nodes, (N, 4), F32)      # (x, y, demand, draft_limit)
    edge_feats = jax.random.normal(k_edges, (E, in_dim), F32)

    params = init_params(k_params, embed_dim)
    ref_edge, ref_node = _reference_forward(node_feats, src, dst, params)

    # f32 propagation path: tight check against the pure-JAX reference.
    edge_f32, node_f32 = tspdl_rl_forward(node_feats, edge_feats, src, dst, params,
                                          prop_dtype=jnp.float32)
    jax.block_until_ready((edge_f32, node_f32))
    assert edge_f32.shape == (E, 1) and node_f32.shape == (N, 1)
    assert bool(jnp.allclose(edge_f32, ref_edge, rtol=1e-3, atol=1e-3))
    assert bool(jnp.allclose(node_f32, ref_node, rtol=1e-3, atol=1e-3))

    # bf16 propagation path (default fast path): looser tolerance vs. the f32 reference.
    edge_preds, node_preds = tspdl_rl_forward(node_feats, edge_feats, src, dst, params)
    jax.block_until_ready((edge_preds, node_preds))
    assert edge_preds.shape == (E, 1) and node_preds.shape == (N, 1)
    assert bool(jnp.all(jnp.isfinite(edge_preds))) and bool(jnp.all(jnp.isfinite(node_preds)))
    assert bool(jnp.allclose(edge_preds, ref_edge, rtol=5e-2, atol=5e-2))
    assert bool(jnp.allclose(node_preds, ref_node, rtol=5e-2, atol=5e-2))

    print("KERNEL_OK")
</pallas_src>

<mosaic_0001>
module attributes {stable_mosaic.version = 11 : i64} {
  func.func @gnn_core_kernel(%arg0: memref<4x8xf32, #tpu.memory_space<vmem>>, %arg1: memref<8x8xf32, #tpu.memory_space<vmem>>, %arg2: memref<64x4xf32, #tpu.memory_space<vmem>>, %arg3: memref<64x1xf32, #tpu.memory_space<vmem>>, %arg4: memref<3x64x64xf32, #tpu.memory_space<vmem>>, %arg5: memref<3x64x1xf32, #tpu.memory_space<vmem>>, %arg6: memref<32x32xf32, #tpu.memory_space<vmem>>, %arg7: memref<32x32xf32, #tpu.memory_space<vmem>>, %arg8: memref<32x1xf32, #tpu.memory_space<vmem>>, %arg9: memref<32x1xf32, #tpu.memory_space<vmem>>, %arg10: memref<1x1xf32, #tpu.memory_space<vmem>>, %arg11: memref<32x8xf32, #tpu.memory_space<vmem>>, %arg12: memref<1x8xf32, #tpu.memory_space<vmem>>) attributes {dimension_semantics = [], scalar_prefetch = 0 : i64, scratch_operands = 0 : i64, tpu.core_type = #tpu.core_type<tc>} {
    %c0 = arith.constant 0 : index
    %c0_0 = arith.constant 0 : index
    %0 = vector.load %arg1[%c0, %c0_0] : memref<8x8xf32, #tpu.memory_space<vmem>>, vector<8x8xf32>
    %c0_1 = arith.constant 0 : index
    %c0_2 = arith.constant 0 : index
    %1 = vector.load %arg2[%c0_1, %c0_2] : memref<64x4xf32, #tpu.memory_space<vmem>>, vector<64x4xf32>
    %c0_3 = arith.constant 0 : index
    %c0_4 = arith.constant 0 : index
    %2 = vector.load %arg0[%c0_3, %c0_4] : memref<4x8xf32, #tpu.memory_space<vmem>>, vector<4x8xf32>
    %cst = arith.constant dense<0.000000e+00> : vector<64x8xf32>
    %3 = tpu.matmul %1, %2, %cst {dimension_numbers = #tpu.dot_dimension_numbers<[1], [0], [0], [1], [0, 0, 1, 1], [], []>} : vector<64x4xf32>, vector<4x8xf32>, vector<64x8xf32> -> vector<64x8xf32>
    %c0_5 = arith.constant 0 : index
    %c0_6 = arith.constant 0 : index
    %4 = vector.load %arg3[%c0_5, %c0_6] : memref<64x1xf32, #tpu.memory_space<vmem>>, vector<64x1xf32>
    %5 = vector.broadcast %4 : vector<64x1xf32> to vector<64x8xf32>
    %6 = arith.addf %3, %5 : vector<64x8xf32>
    %cst_7 = arith.constant dense<0.000000e+00> : vector<64x8xf32>
    %7 = tpu.matmul %6, %0, %cst_7 {dimension_numbers = #tpu.dot_dimension_numbers<[1], [0], [0], [1], [0, 0, 1, 1], [], []>} : vector<64x8xf32>, vector<8x8xf32>, vector<64x8xf32> -> vector<64x8xf32>
    %c0_8 = arith.constant 0 : index
    %c0_9 = arith.constant 0 : index
    %c0_10 = arith.constant 0 : index
    %8 = vector.load %arg4[%c0_8, %c0_9, %c0_10] : memref<3x64x64xf32, #tpu.memory_space<vmem>>, vector<1x64x64xf32>
    %9 = vector.shape_cast %8 : vector<1x64x64xf32> to vector<64x64xf32>
    %cst_11 = arith.constant dense<0.000000e+00> : vector<64x8xf32>
    %10 = tpu.matmul %9, %7, %cst_11 {dimension_numbers = #tpu.dot_dimension_numbers<[1], [0], [0], [1], [0, 0, 1, 1], [], []>} : vector<64x64xf32>, vector<64x8xf32>, vector<64x8xf32> -> vector<64x8xf32>
    %c0_12 = arith.constant 0 : index
    %c0_13 = arith.constant 0 : index
    %c0_14 = arith.constant 0 : index
    %11 = vector.load %arg5[%c0_12, %c0_13, %c0_14] : memref<3x64x1xf32, #tpu.memory_space<vmem>>, vector<1x64x1xf32>
    %12 = vector.shape_cast %11 : vector<1x64x1xf32> to vector<64x1xf32>
    %13 = vector.broadcast %12 : vector<64x1xf32> to vector<64x8xf32>
    %14 = arith.addf %10, %13 : vector<64x8xf32>
    %cst_15 = arith.constant 0.000000e+00 : f32
    %15 = vector.broadcast %cst_15 : f32 to vector<64x8xf32>
    %16 = arith.maximumf %14, %15 : vector<64x8xf32>
    %cst_16 = arith.constant dense<0.000000e+00> : vector<64x8xf32>
    %17 = tpu.matmul %16, %0, %cst_16 {dimension_numbers = #tpu.dot_dimension_numbers<[1], [0], [0], [1], [0, 0, 1, 1], [], []>} : vector<64x8xf32>, vector<8x8xf32>, vector<64x8xf32> -> vector<64x8xf32>
    %c1 = arith.constant 1 : index
    %c0_17 = arith.constant 0 : index
    %c0_18 = arith.constant 0 : index
    %18 = vector.load %arg4[%c1, %c0_17, %c0_18] : memref<3x64x64xf32, #tpu.memory_space<vmem>>, vector<1x64x64xf32>
    %19 = vector.shape_cast %18 : vector<1x64x64xf32> to vector<64x64xf32>
    %cst_19 = arith.constant dense<0.000000e+00> : vector<64x8xf32>
    %20 = tpu.matmul %19, %17, %cst_19 {dimension_numbers = #tpu.dot_dimension_numbers<[1], [0], [0], [1], [0, 0, 1, 1], [], []>} : vector<64x64xf32>, vector<64x8xf32>, vector<64x8xf32> -> vector<64x8xf32>
    %c1_20 = arith.constant 1 : index
    %c0_21 = arith.constant 0 : index
    %c0_22 = arith.constant 0 : index
    %21 = vector.load %arg5[%c1_20, %c0_21, %c0_22] : memref<3x64x1xf32, #tpu.memory_space<vmem>>, vector<1x64x1xf32>
    %22 = vector.shape_cast %21 : vector<1x64x1xf32> to vector<64x1xf32>
    %23 = vector.broadcast %22 : vector<64x1xf32> to vector<64x8xf32>
    %24 = arith.addf %20, %23 : vector<64x8xf32>
    %cst_23 = arith.constant 0.000000e+00 : f32
    %25 = vector.broadcast %cst_23 : f32 to vector<64x8xf32>
    %26 = arith.maximumf %24, %25 : vector<64x8xf32>
    %cst_24 = arith.constant dense<0.000000e+00> : vector<64x8xf32>
    %27 = tpu.matmul %26, %0, %cst_24 {dimension_numbers = #tpu.dot_dimension_numbers<[1], [0], [0], [1], [0, 0, 1, 1], [], []>} : vector<64x8xf32>, vector<8x8xf32>, vector<64x8xf32> -> vector<64x8xf32>
    %c2 = arith.constant 2 : index
    %c0_25 = arith.constant 0 : index
    %c0_26 = arith.constant 0 : index
    %28 = vector.load %arg4[%c2, %c0_25, %c0_26] : memref<3x64x64xf32, #tpu.memory_space<vmem>>, vector<1x64x64xf32>
    %29 = vector.shape_cast %28 : vector<1x64x64xf32> to vector<64x64xf32>
    %cst_27 = arith.constant dense<0.000000e+00> : vector<64x8xf32>
    %30 = tpu.matmul %29, %27, %cst_27 {dimension_numbers = #tpu.dot_dimension_numbers<[1], [0], [0], [1], [0, 0, 1, 1], [], []>} : vector<64x64xf32>, vector<64x8xf32>, vector<64x8xf32> -> vector<64x8xf32>
    %c2_28 = arith.constant 2 : index
    %c0_29 = arith.constant 0 : index
    %c0_30 = arith.constant 0 : index
    %31 = vector.load %arg5[%c2_28, %c0_29, %c0_30] : memref<3x64x1xf32, #tpu.memory_space<vmem>>, vector<1x64x1xf32>
    %32 = vector.shape_cast %31 : vector<1x64x1xf32> to vector<64x1xf32>
    %33 = vector.broadcast %32 : vector<64x1xf32> to vector<64x8xf32>
    %34 = arith.addf %30, %33 : vector<64x8xf32>
    %cst_31 = arith.constant 0.000000e+00 : f32
    %35 = vector.broadcast %cst_31 : f32 to vector<64x8xf32>
    %36 = arith.maximumf %34, %35 : vector<64x8xf32>
    %37 = vector.extract_strided_slice %36 {offsets = [0, 0], sizes = [32, 8], strides = [1, 1]} : vector<64x8xf32> to vector<32x8xf32>
    %38 = vector.extract_strided_slice %36 {offsets = [32, 0], sizes = [32, 8], strides = [1, 1]} : vector<64x8xf32> to vector<32x8xf32>
    %c0_32 = arith.constant 0 : index
    %c0_33 = arith.constant 0 : index
    %39 = vector.load %arg6[%c0_32, %c0_33] : memref<32x32xf32, #tpu.memory_space<vmem>>, vector<32x32xf32>
    %cst_34 = arith.constant dense<0.000000e+00> : vector<32x8xf32>
    %40 = tpu.matmul %39, %37, %cst_34 {dimension_numbers = #tpu.dot_dimension_numbers<[1], [0], [0], [1], [0, 0, 1, 1], [], []>} : vector<32x32xf32>, vector<32x8xf32>, vector<32x8xf32> -> vector<32x8xf32>
    %c0_35 = arith.constant 0 : index
    %c0_36 = arith.constant 0 : index
    %41 = vector.load %arg11[%c0_35, %c0_36] : memref<32x8xf32, #tpu.memory_space<vmem>>, vector<32x8xf32>
    tpu.vector_store %arg11[%c0_35, %c0_36], %40 {strides = array<i32>} : memref<32x8xf32, #tpu.memory_space<vmem>>, vector<32x8xf32>,
    %c0_37 = arith.constant 0 : index
    %c0_38 = arith.constant 0 : index
    %42 = vector.load %arg7[%c0_37, %c0_38] : memref<32x32xf32, #tpu.memory_space<vmem>>, vector<32x32xf32>
    %cst_39 = arith.constant dense<0.000000e+00> : vector<32x8xf32>
    %43 = tpu.matmul %42, %38, %cst_39 {dimension_numbers = #tpu.dot_dimension_numbers<[1], [0], [0], [1], [0, 0, 1, 1], [], []>} : vector<32x32xf32>, vector<32x8xf32>, vector<32x8xf32> -> vector<32x8xf32>
    %c0_40 = arith.constant 0 : index
    %c0_41 = arith.constant 0 : index
    %44 = vector.load %arg8[%c0_40, %c0_41] : memref<32x1xf32, #tpu.memory_space<vmem>>, vector<32x1xf32>
    %45 = vector.broadcast %44 : vector<32x1xf32> to vector<32x8xf32>
    %46 = arith.addf %43, %45 : vector<32x8xf32>
    %cst_42 = arith.constant 0.000000e+00 : f32
    %47 = vector.broadcast %cst_42 : f32 to vector<32x8xf32>
    %48 = arith.maximumf %46, %47 : vector<32x8xf32>
    %c0_43 = arith.constant 0 : index
    %c0_44 = arith.constant 0 : index
    %49 = vector.load %arg9[%c0_43, %c0_44] : memref<32x1xf32, #tpu.memory_space<vmem>>, vector<32x1xf32>
    %50 = vector.broadcast %49 : vector<32x1xf32> to vector<32x8xf32>
    %51 = arith.mulf %48, %50 : vector<32x8xf32>
    %cst_45 = arith.constant dense<0.000000e+00> : vector<8xf32>
    %52 = vector.multi_reduction <add>, %51, %cst_45 [0] : vector<32x8xf32> to vector<8xf32>
    %53 = vector.shape_cast %52 : vector<8xf32> to vector<1x8xf32>
    %c0_46 = arith.constant 0 : index
    %c0_47 = arith.constant 0 : index
    %54 = vector.load %arg10[%c0_46, %c0_47] : memref<1x1xf32, #tpu.memory_space<vmem>>, vector<1x1xf32>
    %55 = vector.broadcast %54 : vector<1x1xf32> to vector<1x8xf32>
    %56 = arith.addf %53, %55 : vector<1x8xf32>
    %c0_48 = arith.constant 0 : index
    %c0_49 = arith.constant 0 : index
    %57 = vector.load %arg12[%c0_48, %c0_49] : memref<1x8xf32, #tpu.memory_space<vmem>>, vector<1x8xf32>
    tpu.vector_store %arg12[%c0_48, %c0_49], %56 {strides = array<i32>} : memref<1x8xf32, #tpu.memory_space<vmem>>, vector<1x8xf32>,
    return
  }
}

</mosaic_0001>

<llo_original>
// kernel: tpu_custom_call.1
$region0: #{tpu_custom_call.1}
  #allocation0 [shape = 'u32[]', space=smem, size = 0x4, offset = 0x4, fixed_abs, tag = 'smem constant byte address 0x4 - core index']
  #allocation1 [shape = 'u32[144,128]{1,0:T(1,128)}', space=vmem, size = 0x12000, scoped, tag = 'internal scratch']
  #allocation2 [shape = 'f32[1,1]{1,0:T(1,128)S(1)}', space=vmem, size = 0x200, scoped, tag = 'scoped memory for tpu_custom_call.1']
  %s0 = inlined_call_operand.vmem [shape: f32[4,8], index: 0, kind: input, shape index: {}]
  %s1 = inlined_call_operand.vmem [shape: f32[8,8], index: 1, kind: input, shape index: {}]
  %s2 = inlined_call_operand.vmem [shape: f32[64,4], index: 2, kind: input, shape index: {}]
  %s3 = inlined_call_operand.vmem [shape: f32[64,1], index: 3, kind: input, shape index: {}]
  %s4 = inlined_call_operand.vmem [shape: f32[3,64,64], index: 4, kind: input, shape index: {}]
  %s5 = inlined_call_operand.vmem [shape: f32[3,64,1], index: 5, kind: input, shape index: {}]
  %s6 = inlined_call_operand.vmem [shape: f32[32,32], index: 6, kind: input, shape index: {}]
  %s7 = inlined_call_operand.vmem [shape: f32[32,32], index: 7, kind: input, shape index: {}]
  %s8 = inlined_call_operand.vmem [shape: f32[32,1], index: 8, kind: input, shape index: {}]
  %s9 = inlined_call_operand.vmem [shape: f32[32,1], index: 9, kind: input, shape index: {}]
  %s10 = inlined_call_operand.<no memory space> [shape: f32[1,1], index: 10, kind: input, shape index: {}]
  %s11 = inlined_call_operand.vmem [shape: f32[32,8], index: 11, kind: output, shape index: {0}]
  %s12 = inlined_call_operand.hbm [shape: f32[1,8], index: 12, kind: output, shape index: {1}]
  %13 = xla_tuple %s11, %s12
  %s14 = sld [smem:[#allocation0]]
  $region62: #{tpu_custom_call.1} parent=0
    _
  %s16 = ssub.s32 1, %s14
  %s17 = scalar_select 0, %s16, %s14
  %v18 = vstv %s10
  %19 = vst [vmem:[#allocation2] sm:$0x1] %v18
  $region1: #{tpu_custom_call.1} parent=0
    #allocation3 [shape = 'u8[512]{0}', space=vmem, size = 0x400, scoped, tag = 'output window, operand 1, single buffered']
    #allocation4 [shape = 's32[1]{0}', space=sflag, size = 0x4, scoped, tag = 'scoped memory for tpu_custom_call.1']
    %20 = vsyncpa [#allocation4], 0
    // Predicated region
    $region2: #{tpu_custom_call.1} parent=1 // pred_check
      _
    $region3: #{tpu_custom_call.1} parent=1 // pred_check_branch
      %22 = sbr.rel (0) target = $region5
    $region4: #{tpu_custom_call.1} parent=1 // pred_region
      _
    $region5: #{tpu_custom_call.1} parent=1 // pred_fallthru
      _
    // Predicated region
    $region6: #{tpu_custom_call.1} parent=1 // pred_check
      _
    $region7: #{tpu_custom_call.1} parent=1 // pred_check_branch
      %24 = sbr.rel (0) target = $region9
    $region8: #{tpu_custom_call.1} parent=1 // pred_region
      _
    $region9: #{tpu_custom_call.1} parent=1 // pred_fallthru
      _
    // Predicated region
    $region10: #{tpu_custom_call.1} parent=1 // pred_check
      _
    $region11: #{tpu_custom_call.1} parent=1 // pred_check_branch
      %26 = sbr.rel (0) target = $region13
    $region12: #{tpu_custom_call.1} parent=1 // pred_region
      _
    $region13: #{tpu_custom_call.1} parent=1 // pred_fallthru
      _
    // Predicated region
    $region14: #{tpu_custom_call.1} parent=1 // pred_check
      _
    $region15: #{tpu_custom_call.1} parent=1 // pred_check_branch
      %28 = sbr.rel (0) target = $region17
    $region16: #{tpu_custom_call.1} parent=1 // pred_region
      _
    $region17: #{tpu_custom_call.1} parent=1 // pred_fallthru
      _
    // Predicated region
    $region18: #{tpu_custom_call.1} parent=1 // pred_check
      _
    $region19: #{tpu_custom_call.1} parent=1 // pred_check_branch
      %30 = sbr.rel (0) target = $region21
    $region20: #{tpu_custom_call.1} parent=1 // pred_region
      _
    $region21: #{tpu_custom_call.1} parent=1 // pred_fallthru
      _
    // Predicated region
    $region22: #{tpu_custom_call.1} parent=1 // pred_check
      _
    $region23: #{tpu_custom_call.1} parent=1 // pred_check_branch
      %32 = sbr.rel (0) target = $region25
    $region24: #{tpu_custom_call.1} parent=1 // pred_region
      _
    $region25: #{tpu_custom_call.1} parent=1 // pred_fallthru
      _
    // Predicated region
    $region26: #{tpu_custom_call.1} parent=1 // pred_check
      _
    $region27: #{tpu_custom_call.1} parent=1 // pred_check_branch
      %34 = sbr.rel (0) target = $region29
    $region28: #{tpu_custom_call.1} parent=1 // pred_region
      _
    $region29: #{tpu_custom_call.1} parent=1 // pred_fallthru
      _
    // Predicated region
    $region30: #{tpu_custom_call.1} parent=1 // pred_check
      _
    $region31: #{tpu_custom_call.1} parent=1 // pred_check_branch
      %36 = sbr.rel (0) target = $region33
    $region32: #{tpu_custom_call.1} parent=1 // pred_region
      _
    $region33: #{tpu_custom_call.1} parent=1 // pred_fallthru
      _
    // Predicated region
    $region34: #{tpu_custom_call.1} parent=1 // pred_check
      _
    $region35: #{tpu_custom_call.1} parent=1 // pred_check_branch
      %38 = sbr.rel (0) target = $region37
    $region36: #{tpu_custom_call.1} parent=1 // pred_region
      _
    $region37: #{tpu_custom_call.1} parent=1 // pred_fallthru
      _
    // Predicated region
    $region38: #{tpu_custom_call.1} parent=1 // pred_check
      _
    $region39: #{tpu_custom_call.1} parent=1 // pred_check_branch
      %40 = sbr.rel (0) target = $region41
    $region40: #{tpu_custom_call.1} parent=1 // pred_region
      _
    $region41: #{tpu_custom_call.1} parent=1 // pred_fallthru
      _
    // Predicated region
    $region42: #{tpu_custom_call.1} parent=1 // pred_check
      _
    $region43: #{tpu_custom_call.1} parent=1 // pred_check_branch
      %42 = sbr.rel (0) target = $region45
    $region44: #{tpu_custom_call.1} parent=1 // pred_region
      _
    $region45: #{tpu_custom_call.1} parent=1 // pred_fallthru
      _
    %v43 = vld [vmem:[%s1] sm:$0xff]
    %v44 = vld [vmem:[%s2] sm:$0xff]
    %v45 = vld [vmem:[%s2 + $0x8] sm:$0xff]
    %v46 = vld [vmem:[%s2 + $0x10] sm:$0xff]
    %v47 = vld [vmem:[%s2 + $0x18] sm:$0xff]
    %v48 = vld [vmem:[%s2 + $0x20] sm:$0xff]
    %v49 = vld [vmem:[%s2 + $0x28] sm:$0xff]
    %v50 = vld [vmem:[%s2 + $0x30] sm:$0xff]
    %v51 = vld [vmem:[%s2 + $0x38] sm:$0xff]
    %v52 = vld [vmem:[%s0] sm:$0xf]
    %v53 = vld [vmem:[%s3] sm:$0xff]
    %v54 = vld [vmem:[%s3 + $0x8] sm:$0xff]
    %v55 = vld [vmem:[%s3 + $0x10] sm:$0xff]
    %v56 = vld [vmem:[%s3 + $0x18] sm:$0xff]
    %v57 = vld [vmem:[%s3 + $0x20] sm:$0xff]
    %v58 = vld [vmem:[%s3 + $0x28] sm:$0xff]
    %v59 = vld [vmem:[%s3 + $0x30] sm:$0xff]
    %v60 = vld [vmem:[%s3 + $0x38] sm:$0xff]
    %62 = vset.pattern.permute.xlu0 0
    %63 = vperm.xlu0 %62, %v53
    %v64 = vpop.permute.xlu0 %63
    %67 = vset.pattern.permute.xlu0 0
    %68 = vperm.xlu0 %67, %v54
    %v69 = vpop.permute.xlu0 %68
    %72 = vset.pattern.permute.xlu0 0
    %73 = vperm.xlu0 %72, %v55
    %v74 = vpop.permute.xlu0 %73
    %77 = vset.pattern.permute.xlu0 0
    %78 = vperm.xlu0 %77, %v56
    %v79 = vpop.permute.xlu0 %78
    %82 = vset.pattern.permute.xlu0 0
    %83 = vperm.xlu0 %82, %v57
    %v84 = vpop.permute.xlu0 %83
    %87 = vset.pattern.permute.xlu0 0
    %88 = vperm.xlu0 %87, %v58
    %v89 = vpop.permute.xlu0 %88
    %92 = vset.pattern.permute.xlu0 0
    %93 = vperm.xlu0 %92, %v59
    %v94 = vpop.permute.xlu0 %93
    %97 = vset.pattern.permute.xlu0 0
    %98 = vperm.xlu0 %97, %v60
    %v99 = vpop.permute.xlu0 %98
    %vm101 = vcmask 31744
    %v103 = vsel %vm101, %v44, 0
    %v106 = vsel %vm101, %v45, 0
    %v109 = vsel %vm101, %v46, 0
    %v112 = vsel %vm101, %v47, 0
    %v115 = vsel %vm101, %v48, 0
    %v118 = vsel %vm101, %v49, 0
    %v121 = vsel %vm101, %v50, 0
    %v124 = vsel %vm101, %v51, 0
    %vm126 = vcmask 1043456
    %v128 = vsel %vm126, %v52, 0
    %130 = vmatprep.subr.mxu0 0.0
    %131 = vmatpush1.msra.mxu0 0.0
    %132 = vmatprep.subr.mxu0 0.0
    %133 = vmatpush1.msra.mxu0 0.0
    %134 = vmatprep.subr.mxu0 0.0
    %135 = vmatpush1.msra.mxu0 0.0
    %136 = vmatprep.subr.mxu0 0.0
    %137 = vmatpush1.msra.mxu0 0.0
    %138 = vmatprep.subr.mxu0 0.0
    %139 = vmatpush1.msra.mxu0 0.0
    %140 = vmatprep.subr.mxu0 0.0
    %141 = vmatpush1.msra.mxu0 0.0
    %142 = vmatprep.subr.mxu0 0.0
    %143 = vmatpush1.msra.mxu0 0.0
    %144 = vmatprep.subr.mxu0 0.0
    %145 = vmatpush1.msra.mxu0 0.0
    %146 = vmatprep.subr.mxu0 0.0
    %147 = vmatpush1.msra.mxu0 0.0
    %148 = vmatprep.subr.mxu0 0.0
    %149 = vmatpush1.msra.mxu0 0.0
    %150 = vmatprep.subr.mxu0 0.0
    %151 = vmatpush1.msra.mxu0 0.0
    %152 = vmatprep.subr.mxu0 0.0
    %153 = vmatpush1.msra.mxu0 0.0
    %154 = vmatprep.subr.mxu0 0.0
    %155 = vmatpush1.msra.mxu0 0.0
    %156 = vmatprep.subr.mxu0 0.0
    %157 = vmatpush1.msra.mxu0 0.0
    %158 = vmatprep.subr.mxu0 0.0
    %159 = vmatpush1.msra.mxu0 0.0
    %160 = vmatprep.subr.mxu0 0.0
    %161 = vmatpush1.msra.mxu0 %v128
    %162 = vmatprep.subr.mxu0 0.0
    %163 = vmatpush2.msra.mxu0 0.0
    %164 = vmatprep.subr.mxu0 0.0
    %165 = vmatpush2.msra.mxu0 0.0
    %166 = vmatprep.subr.mxu0 0.0
    %167 = vmatpush2.msra.mxu0 0.0
    %168 = vmatprep.subr.mxu0 0.0
    %169 = vmatpush2.msra.mxu0 0.0
    %170 = vmatprep.subr.mxu0 0.0
    %171 = vmatpush2.msra.mxu0 0.0
    %172 = vmatprep.subr.mxu0 0.0
    %173 = vmatpush2.msra.mxu0 0.0
    %174 = vmatprep.subr.mxu0 0.0
    %175 = vmatpush2.msra.mxu0 0.0
    %176 = vmatprep.subr.mxu0 0.0
    %177 = vmatpush2.msra.mxu0 0.0
    %178 = vmatprep.subr.mxu0 0.0
    %179 = vmatpush2.msra.mxu0 0.0
    %180 = vmatprep.subr.mxu0 0.0
    %181 = vmatpush2.msra.mxu0 0.0
    %182 = vmatprep.subr.mxu0 0.0
    %183 = vmatpush2.msra.mxu0 0.0
    %184 = vmatprep.subr.mxu0 0.0
    %185 = vmatpush2.msra.mxu0 0.0
    %186 = vmatprep.subr.mxu0 0.0
    %187 = vmatpush2.msra.mxu0 0.0
    %188 = vmatprep.subr.mxu0 0.0
    %189 = vmatpush2.msra.mxu0 0.0
    %190 = vmatprep.subr.mxu0 0.0
    %191 = vmatpush2.msra.mxu0 0.0
    %192 = vmatprep.subr.mxu0 0.0
    %193 = vmatpush2.msra.mxu0 0.0
    %194 = vmatprep.mubr.f32.mxu0 0.0
    %195 = vmatmul.mubr.f32.gmra.mxu0 %v103
    %v196 = vpop.f32.mrf.mxu0
    %v197 = vadd.f32 %v64, %v196
    %v198 = vpop.f32.mrf.mxu0
    %199 = vmatprep.mubr.f32.mxu0 0.0
    %200 = vmatmul.mubr.f32.gmra.mxu0 %v106
    %v201 = vpop.f32.mrf.mxu0
    %v202 = vadd.f32 %v69, %v201
    %v203 = vpop.f32.mrf.mxu0
    %204 = vmatprep.mubr.f32.mxu0 0.0
    %205 = vmatmul.mubr.f32.gmra.mxu0 %v109
    %v206 = vpop.f32.mrf.mxu0
    %v207 = vadd.f32 %v74, %v206
    %v208 = vpop.f32.mrf.mxu0
    %209 = vmatprep.mubr.f32.mxu0 0.0
    %210 = vmatmul.mubr.f32.gmra.mxu0 %v112
    %v211 = vpop.f32.mrf.mxu0
    %v212 = vadd.f32 %v79, %v211
    %v213 = vpop.f32.mrf.mxu0
    %214 = vmatprep.mubr.f32.mxu0 0.0
    %215 = vmatmul.mubr.f32.gmra.mxu0 %v115
    %v216 = vpop.f32.mrf.mxu0
    %v217 = vadd.f32 %v84, %v216
    %v218 = vpop.f32.mrf.mxu0
    %219 = vmatprep.mubr.f32.mxu0 0.0
    %220 = vmatmul.mubr.f32.gmra.mxu0 %v118
    %v221 = vpop.f32.mrf.mxu0
    %v222 = vadd.f32 %v89, %v221
    %v223 = vpop.f32.mrf.mxu0
    %224 = vmatprep.mubr.f32.mxu0 0.0
    %225 = vmatmul.mubr.f32.gmra.mxu0 %v121
    %v226 = vpop.f32.mrf.mxu0
    %v227 = vadd.f32 %v94, %v226
    %v228 = vpop.f32.mrf.mxu0
    %229 = vmatprep.mubr.f32.mxu0 0.0
    %230 = vmatmul.mubr.f32.gmra.mxu0 %v124
    %v231 = vpop.f32.mrf.mxu0
    %v232 = vadd.f32 %v99, %v231
    %v233 = vpop.f32.mrf.mxu0
    %234 = vdwg.mxu0
    %vm235 = vcmask 64512
    %v237 = vsel %vm235, %v197, 0
    %v240 = vsel %vm235, %v202, 0
    %v243 = vsel %vm235, %v207, 0
    %v246 = vsel %vm235, %v212, 0
    %v249 = vsel %vm235, %v217, 0
    %v252 = vsel %vm235, %v222, 0
    %v255 = vsel %vm235, %v227, 0
    %v258 = vsel %vm235, %v232, 0
    %260 = vmatprep.subr.mxu0 0.0
    %261 = vmatpush1.msra.mxu0 0.0
    %262 = vmatprep.subr.mxu0 0.0
    %263 = vmatpush1.msra.mxu0 0.0
    %264 = vmatprep.subr.mxu0 0.0
    %265 = vmatpush1.msra.mxu0 0.0
    %266 = vmatprep.subr.mxu0 0.0
    %267 = vmatpush1.msra.mxu0 0.0
    %268 = vmatprep.subr.mxu0 0.0
    %269 = vmatpush1.msra.mxu0 0.0
    %270 = vmatprep.subr.mxu0 0.0
    %271 = vmatpush1.msra.mxu0 0.0
    %272 = vmatprep.subr.mxu0 0.0
    %273 = vmatpush1.msra.mxu0 0.0
    %274 = vmatprep.subr.mxu0 0.0
    %275 = vmatpush1.msra.mxu0 0.0
    %276 = vmatprep.subr.mxu0 0.0
    %277 = vmatpush1.msra.mxu0 0.0
    %278 = vmatprep.subr.mxu0 0.0
    %279 = vmatpush1.msra.mxu0 0.0
    %280 = vmatprep.subr.mxu0 0.0
    %281 = vmatpush1.msra.mxu0 0.0
    %282 = vmatprep.subr.mxu0 0.0
    %283 = vmatpush1.msra.mxu0 0.0
    %284 = vmatprep.subr.mxu0 0.0
    %285 = vmatpush1.msra.mxu0 0.0
    %286 = vmatprep.subr.mxu0 0.0
    %287 = vmatpush1.msra.mxu0 0.0
    %288 = vmatprep.subr.mxu0 0.0
    %289 = vmatpush1.msra.mxu0 0.0
    %290 = vmatprep.subr.mxu0 0.0
    %291 = vmatpush1.msra.mxu0 %v43
    %292 = vmatprep.subr.mxu0 0.0
    %293 = vmatpush2.msra.mxu0 0.0
    %294 = vmatprep.subr.mxu0 0.0
    %295 = vmatpush2.msra.mxu0 0.0
    %296 = vmatprep.subr.mxu0 0.0
    %297 = vmatpush2.msra.mxu0 0.0
    %298 = vmatprep.subr.mxu0 0.0
    %299 = vmatpush2.msra.mxu0 0.0
    %300 = vmatprep.subr.mxu0 0.0
    %301 = vmatpush2.msra.mxu0 0.0
    %302 = vmatprep.subr.mxu0 0.0
    %303 = vmatpush2.msra.mxu0 0.0
    %304 = vmatprep.subr.mxu0 0.0
    %305 = vmatpush2.msra.mxu0 0.0
    %306 = vmatprep.subr.mxu0 0.0
    %307 = vmatpush2.msra.mxu0 0.0
    %308 = vmatprep.subr.mxu0 0.0
    %309 = vmatpush2.msra.mxu0 0.0
    %310 = vmatprep.subr.mxu0 0.0
    %311 = vmatpush2.msra.mxu0 0.0
    %312 = vmatprep.subr.mxu0 0.0
    %313 = vmatpush2.msra.mxu0 0.0
    %314 = vmatprep.subr.mxu0 0.0
    %315 = vmatpush2.msra.mxu0 0.0
    %316 = vmatprep.subr.mxu0 0.0
    %317 = vmatpush2.msra.mxu0 0.0
    %318 = vmatprep.subr.mxu0 0.0
    %319 = vmatpush2.msra.mxu0 0.0
    %320 = vmatprep.subr.mxu0 0.0
    %321 = vmatpush2.msra.mxu0 0.0
    %322 = vmatprep.subr.mxu0 0.0
    %323 = vmatpush2.msra.mxu0 0.0
    %324 = vmatprep.mubr.f32.mxu0 0.0
    %325 = vmatmul.mubr.f32.gmra.mxu0 %v237
    %v326 = vpop.f32.mrf.mxu0
    %v327 = vadd.f32 0.0, %v326
    %v328 = vpop.f32.mrf.mxu0
    %329 = vmatprep.mubr.f32.mxu0 0.0
    %330 = vmatmul.mubr.f32.gmra.mxu0 %v240
    %v331 = vpop.f32.mrf.mxu0
    %v332 = vadd.f32 0.0, %v331
    %v333 = vpop.f32.mrf.mxu0
    %334 = vmatprep.mubr.f32.mxu0 0.0
    %335 = vmatmul.mubr.f32.gmra.mxu0 %v243
    %v336 = vpop.f32.mrf.mxu0
    %v337 = vadd.f32 0.0, %v336
    %v338 = vpop.f32.mrf.mxu0
    %339 = vmatprep.mubr.f32.mxu0 0.0
    %340 = vmatmul.mubr.f32.gmra.mxu0 %v246
    %v341 = vpop.f32.mrf.mxu0
    %v342 = vadd.f32 0.0, %v341
    %v343 = vpop.f32.mrf.mxu0
    %344 = vmatprep.mubr.f32.mxu0 0.0
    %345 = vmatmul.mubr.f32.gmra.mxu0 %v249
    %v346 = vpop.f32.mrf.mxu0
    %v347 = vadd.f32 0.0, %v346
    %v348 = vpop.f32.mrf.mxu0
    %349 = vmatprep.mubr.f32.mxu0 0.0
    %350 = vmatmul.mubr.f32.gmra.mxu0 %v252
    %v351 = vpop.f32.mrf.mxu0
    %v352 = vadd.f32 0.0, %v351
    %v353 = vpop.f32.mrf.mxu0
    %354 = vmatprep.mubr.f32.mxu0 0.0
    %355 = vmatmul.mubr.f32.gmra.mxu0 %v255
    %v356 = vpop.f32.mrf.mxu0
    %v357 = vadd.f32 0.0, %v356
    %v358 = vpop.f32.mrf.mxu0
    %359 = vmatprep.mubr.f32.mxu0 0.0
    %360 = vmatmul.mubr.f32.gmra.mxu0 %v258
    %v361 = vpop.f32.mrf.mxu0
    %v362 = vadd.f32 0.0, %v361
    %v363 = vpop.f32.mrf.mxu0
    %364 = vdwg.mxu0
    %v365 = vld [vmem:[%s4] sm:$0xff]
    %v366 = vld [vmem:[%s4 + $0x8] sm:$0xff]
    %v367 = vld [vmem:[%s4 + $0x10] sm:$0xff]
    %v368 = vld [vmem:[%s4 + $0x18] sm:$0xff]
    %v369 = vld [vmem:[%s4 + $0x20] sm:$0xff]
    %v370 = vld [vmem:[%s4 + $0x28] sm:$0xff]
    %v371 = vld [vmem:[%s4 + $0x30] sm:$0xff]
    %v372 = vld [vmem:[%s4 + $0x38] sm:$0xff]
    %v373 = vld [vmem:[%s5] sm:$0xff]
    %v374 = vld [vmem:[%s5 + $0x8] sm:$0xff]
    %v375 = vld [vmem:[%s5 + $0x10] sm:$0xff]
    %v376 = vld [vmem:[%s5 + $0x18] sm:$0xff]
    %v377 = vld [vmem:[%s5 + $0x20] sm:$0xff]
    %v378 = vld [vmem:[%s5 + $0x28] sm:$0xff]
    %v379 = vld [vmem:[%s5 + $0x30] sm:$0xff]
    %v380 = vld [vmem:[%s5 + $0x38] sm:$0xff]
    %382 = vset.pattern.permute.xlu0 0
    %383 = vperm.xlu0 %382, %v373
    %v384 = vpop.permute.xlu0 %383
    %387 = vset.pattern.permute.xlu0 0
    %388 = vperm.xlu0 %387, %v374
    %v389 = vpop.permute.xlu0 %388
    %392 = vset.pattern.permute.xlu0 0
    %393 = vperm.xlu0 %392, %v375
    %v394 = vpop.permute.xlu0 %393
    %397 = vset.pattern.permute.xlu0 0
    %398 = vperm.xlu0 %397, %v376
    %v399 = vpop.permute.xlu0 %398
    %402 = vset.pattern.permute.xlu0 0
    %403 = vperm.xlu0 %402, %v377
    %v404 = vpop.permute.xlu0 %403
    %407 = vset.pattern.permute.xlu0 0
    %408 = vperm.xlu0 %407, %v378
    %v409 = vpop.permute.xlu0 %408
    %412 = vset.pattern.permute.xlu0 0
    %413 = vperm.xlu0 %412, %v379
    %v414 = vpop.permute.xlu0 %413
    %417 = vset.pattern.permute.xlu0 0
    %418 = vperm.xlu0 %417, %v380
    %v419 = vpop.permute.xlu0 %418
    %vm421 = vcmask 523264
    %v423 = vsel %vm421, %v365, 0
    %v426 = vsel %vm421, %v366, 0
    %v429 = vsel %vm421, %v367, 0
    %v432 = vsel %vm421, %v368, 0
    %v435 = vsel %vm421, %v369, 0
    %v438 = vsel %vm421, %v370, 0
    %v441 = vsel %vm421, %v371, 0
    %v444 = vsel %vm421, %v372, 0
    %446 = vmatprep.subr.mxu0 0.0
    %447 = vmatpush1.msra.mxu0 0.0
    %448 = vmatprep.subr.mxu0 0.0
    %449 = vmatpush1.msra.mxu0 0.0
    %450 = vmatprep.subr.mxu0 0.0
    %451 = vmatpush1.msra.mxu0 0.0
    %452 = vmatprep.subr.mxu0 0.0
    %453 = vmatpush1.msra.mxu0 0.0
    %454 = vmatprep.subr.mxu0 0.0
    %455 = vmatpush1.msra.mxu0 0.0
    %456 = vmatprep.subr.mxu0 0.0
    %457 = vmatpush1.msra.mxu0 0.0
    %458 = vmatprep.subr.mxu0 0.0
    %459 = vmatpush1.msra.mxu0 0.0
    %460 = vmatprep.subr.mxu0 0.0
    %461 = vmatpush1.msra.mxu0 0.0
    %462 = vmatprep.subr.mxu0 0.0
    %463 = vmatpush1.msra.mxu0 %v362
    %464 = vmatprep.subr.mxu0 0.0
    %465 = vmatpush1.msra.mxu0 %v357
    %466 = vmatprep.subr.mxu0 0.0
    %467 = vmatpush1.msra.mxu0 %v352
    %468 = vmatprep.subr.mxu0 0.0
    %469 = vmatpush1.msra.mxu0 %v347
    %470 = vmatprep.subr.mxu0 0.0
    %471 = vmatpush1.msra.mxu0 %v342
    %472 = vmatprep.subr.mxu0 0.0
    %473 = vmatpush1.msra.mxu0 %v337
    %474 = vmatprep.subr.mxu0 0.0
    %475 = vmatpush1.msra.mxu0 %v332
    %476 = vmatprep.subr.mxu0 0.0
    %477 = vmatpush1.msra.mxu0 %v327
    %478 = vmatprep.subr.mxu0 0.0
    %479 = vmatpush2.msra.mxu0 0.0
    %480 = vmatprep.subr.mxu0 0.0
    %481 = vmatpush2.msra.mxu0 0.0
    %482 = vmatprep.subr.mxu0 0.0
    %483 = vmatpush2.msra.mxu0 0.0
    %484 = vmatprep.subr.mxu0 0.0
    %485 = vmatpush2.msra.mxu0 0.0
    %486 = vmatprep.subr.mxu0 0.0
    %487 = vmatpush2.msra.mxu0 0.0
    %488 = vmatprep.subr.mxu0 0.0
    %489 = vmatpush2.msra.mxu0 0.0
    %490 = vmatprep.subr.mxu0 0.0
    %491 = vmatpush2.msra.mxu0 0.0
    %492 = vmatprep.subr.mxu0 0.0
    %493 = vmatpush2.msra.mxu0 0.0
    %494 = vmatprep.subr.mxu0 0.0
    %495 = vmatpush2.msra.mxu0 0.0
    %496 = vmatprep.subr.mxu0 0.0
    %497 = vmatpush2.msra.mxu0 0.0
    %498 = vmatprep.subr.mxu0 0.0
    %499 = vmatpush2.msra.mxu0 0.0
    %500 = vmatprep.subr.mxu0 0.0
    %501 = vmatpush2.msra.mxu0 0.0
    %502 = vmatprep.subr.mxu0 0.0
    %503 = vmatpush2.msra.mxu0 0.0
    %504 = vmatprep.subr.mxu0 0.0
    %505 = vmatpush2.msra.mxu0 0.0
    %506 = vmatprep.subr.mxu0 0.0
    %507 = vmatpush2.msra.mxu0 0.0
    %508 = vmatprep.subr.mxu0 0.0
    %509 = vmatpush2.msra.mxu0 0.0
    %510 = vmatprep.mubr.f32.mxu0 0.0
    %511 = vmatmul.mubr.f32.gmra.mxu0 %v423
    %v512 = vpop.f32.mrf.mxu0
    %v513 = vadd.f32 %v384, %v512
    %v514 = vpop.f32.mrf.mxu0
    %515 = vmatprep.mubr.f32.mxu0 0.0
    %516 = vmatmul.mubr.f32.gmra.mxu0 %v426
    %v517 = vpop.f32.mrf.mxu0
    %v518 = vadd.f32 %v389, %v517
    %v519 = vpop.f32.mrf.mxu0
    %520 = vmatprep.mubr.f32.mxu0 0.0
    %521 = vmatmul.mubr.f32.gmra.mxu0 %v429
    %v522 = vpop.f32.mrf.mxu0
    %v523 = vadd.f32 %v394, %v522
    %v524 = vpop.f32.mrf.mxu0
    %525 = vmatprep.mubr.f32.mxu0 0.0
    %526 = vmatmul.mubr.f32.gmra.mxu0 %v432
    %v527 = vpop.f32.mrf.mxu0
    %v528 = vadd.f32 %v399, %v527
    %v529 = vpop.f32.mrf.mxu0
    %530 = vmatprep.mubr.f32.mxu0 0.0
    %531 = vmatmul.mubr.f32.gmra.mxu0 %v435
    %v532 = vpop.f32.mrf.mxu0
    %v533 = vadd.f32 %v404, %v532
    %v534 = vpop.f32.mrf.mxu0
    %535 = vmatprep.mubr.f32.mxu0 0.0
    %536 = vmatmul.mubr.f32.gmra.mxu0 %v438
    %v537 = vpop.f32.mrf.mxu0
    %v538 = vadd.f32 %v409, %v537
    %v539 = vpop.f32.mrf.mxu0
    %540 = vmatprep.mubr.f32.mxu0 0.0
    %541 = vmatmul.mubr.f32.gmra.mxu0 %v441
    %v542 = vpop.f32.mrf.mxu0
    %v543 = vadd.f32 %v414, %v542
    %v544 = vpop.f32.mrf.mxu0
    %545 = vmatprep.mubr.f32.mxu0 0.0
    %546 = vmatmul.mubr.f32.gmra.mxu0 %v444
    %v547 = vpop.f32.mrf.mxu0
    %v548 = vadd.f32 %v419, %v547
    %v549 = vpop.f32.mrf.mxu0
    %550 = vdwg.mxu0
    %v551 = vmax.f32 %v513, 0.0
    %v552 = vmax.f32 %v518, 0.0
    %v553 = vmax.f32 %v523, 0.0
    %v554 = vmax.f32 %v528, 0.0
    %v555 = vmax.f32 %v533, 0.0
    %v556 = vmax.f32 %v538, 0.0
    %v557 = vmax.f32 %v543, 0.0
    %v558 = vmax.f32 %v548, 0.0
    %v560 = vsel %vm235, %v551, 0
    %v563 = vsel %vm235, %v552, 0
    %v566 = vsel %vm235, %v553, 0
    %v569 = vsel %vm235, %v554, 0
    %v572 = vsel %vm235, %v555, 0
    %v575 = vsel %vm235, %v556, 0
    %v578 = vsel %vm235, %v557, 0
    %v581 = vsel %vm235, %v558, 0
    %583 = vmatprep.subr.mxu0 0.0
    %584 = vmatpush1.msra.mxu0 0.0
    %585 = vmatprep.subr.mxu0 0.0
    %586 = vmatpush1.msra.mxu0 0.0
    %587 = vmatprep.subr.mxu0 0.0
    %588 = vmatpush1.msra.mxu0 0.0
    %589 = vmatprep.subr.mxu0 0.0
    %590 = vmatpush1.msra.mxu0 0.0
    %591 = vmatprep.subr.mxu0 0.0
    %592 = vmatpush1.msra.mxu0 0.0
    %593 = vmatprep.subr.mxu0 0.0
    %594 = vmatpush1.msra.mxu0 0.0
    %595 = vmatprep.subr.mxu0 0.0
    %596 = vmatpush1.msra.mxu0 0.0
    %597 = vmatprep.subr.mxu0 0.0
    %598 = vmatpush1.msra.mxu0 0.0
    %599 = vmatprep.subr.mxu0 0.0
    %600 = vmatpush1.msra.mxu0 0.0
    %601 = vmatprep.subr.mxu0 0.0
    %602 = vmatpush1.msra.mxu0 0.0
    %603 = vmatprep.subr.mxu0 0.0
    %604 = vmatpush1.msra.mxu0 0.0
    %605 = vmatprep.subr.mxu0 0.0
    %606 = vmatpush1.msra.mxu0 0.0
    %607 = vmatprep.subr.mxu0 0.0
    %608 = vmatpush1.msra.mxu0 0.0
    %609 = vmatprep.subr.mxu0 0.0
    %610 = vmatpush1.msra.mxu0 0.0
    %611 = vmatprep.subr.mxu0 0.0
    %612 = vmatpush1.msra.mxu0 0.0
    %613 = vmatprep.subr.mxu0 0.0
    %614 = vmatpush1.msra.mxu0 %v43
    %615 = vmatprep.subr.mxu0 0.0
    %616 = vmatpush2.msra.mxu0 0.0
    %617 = vmatprep.subr.mxu0 0.0
    %618 = vmatpush2.msra.mxu0 0.0
    %619 = vmatprep.subr.mxu0 0.0
    %620 = vmatpush2.msra.mxu0 0.0
    %621 = vmatprep.subr.mxu0 0.0
    %622 = vmatpush2.msra.mxu0 0.0
    %623 = vmatprep.subr.mxu0 0.0
    %624 = vmatpush2.msra.mxu0 0.0
    %625 = vmatprep.subr.mxu0 0.0
    %626 = vmatpush2.msra.mxu0 0.0
    %627 = vmatprep.subr.mxu0 0.0
    %628 = vmatpush2.msra.mxu0 0.0
    %629 = vmatprep.subr.mxu0 0.0
    %630 = vmatpush2.msra.mxu0 0.0
    %631 = vmatprep.subr.mxu0 0.0
    %632 = vmatpush2.msra.mxu0 0.0
    %633 = vmatprep.subr.mxu0 0.0
    %634 = vmatpush2.msra.mxu0 0.0
    %635 = vmatprep.subr.mxu0 0.0
    %636 = vmatpush2.msra.mxu0 0.0
    %637 = vmatprep.subr.mxu0 0.0
    %638 = vmatpush2.msra.mxu0 0.0
    %639 = vmatprep.subr.mxu0 0.0
    %640 = vmatpush2.msra.mxu0 0.0
    %641 = vmatprep.subr.mxu0 0.0
    %642 = vmatpush2.msra.mxu0 0.0
    %643 = vmatprep.subr.mxu0 0.0
    %644 = vmatpush2.msra.mxu0 0.0
    %645 = vmatprep.subr.mxu0 0.0
    %646 = vmatpush2.msra.mxu0 0.0
    %647 = vmatprep.mubr.f32.mxu0 0.0
    %648 = vmatmul.mubr.f32.gmra.mxu0 %v560
    %v649 = vpop.f32.mrf.mxu0
    %v650 = vadd.f32 0.0, %v649
    %v651 = vpop.f32.mrf.mxu0
    %652 = vmatprep.mubr.f32.mxu0 0.0
    %653 = vmatmul.mubr.f32.gmra.mxu0 %v563
    %v654 = vpop.f32.mrf.mxu0
    %v655 = vadd.f32 0.0, %v654
    %v656 = vpop.f32.mrf.mxu0
    %657 = vmatprep.mubr.f32.mxu0 0.0
    %658 = vmatmul.mubr.f32.gmra.mxu0 %v566
    %v659 = vpop.f32.mrf.mxu0
    %v660 = vadd.f32 0.0, %v659
    %v661 = vpop.f32.mrf.mxu0
    %662 = vmatprep.mubr.f32.mxu0 0.0
    %663 = vmatmul.mubr.f32.gmra.mxu0 %v569
    %v664 = vpop.f32.mrf.mxu0
    %v665 = vadd.f32 0.0, %v664
    %v666 = vpop.f32.mrf.mxu0
    %667 = vmatprep.mubr.f32.mxu0 0.0
    %668 = vmatmul.mubr.f32.gmra.mxu0 %v572
    %v669 = vpop.f32.mrf.mxu0
    %v670 = vadd.f32 0.0, %v669
    %v671 = vpop.f32.mrf.mxu0
    %672 = vmatprep.mubr.f32.mxu0 0.0
    %673 = vmatmul.mubr.f32.gmra.mxu0 %v575
    %v674 = vpop.f32.mrf.mxu0
    %v675 = vadd.f32 0.0, %v674
    %v676 = vpop.f32.mrf.mxu0
    %677 = vmatprep.mubr.f32.mxu0 0.0
    %678 = vmatmul.mubr.f32.gmra.mxu0 %v578
    %v679 = vpop.f32.mrf.mxu0
    %v680 = vadd.f32 0.0, %v679
    %v681 = vpop.f32.mrf.mxu0
    %682 = vmatprep.mubr.f32.mxu0 0.0
    %683 = vmatmul.mubr.f32.gmra.mxu0 %v581
    %v684 = vpop.f32.mrf.mxu0
    %v685 = vadd.f32 0.0, %v684
    %v686 = vpop.f32.mrf.mxu0
    %687 = vdwg.mxu0
    %s688 = scalar_lea.vmem %s4, 64
    %v689 = vld [vmem:[%s688] sm:$0xff]
    %v690 = vld [vmem:[%s688 + $0x8] sm:$0xff]
    %v691 = vld [vmem:[%s688 + $0x10] sm:$0xff]
    %v692 = vld [vmem:[%s688 + $0x18] sm:$0xff]
    %v693 = vld [vmem:[%s688 + $0x20] sm:$0xff]
    %v694 = vld [vmem:[%s688 + $0x28] sm:$0xff]
    %v695 = vld [vmem:[%s688 + $0x30] sm:$0xff]
    %v696 = vld [vmem:[%s688 + $0x38] sm:$0xff]
    %s697 = scalar_lea.vmem %s5, 64
    %v698 = vld [vmem:[%s697] sm:$0xff]
    %v699 = vld [vmem:[%s697 + $0x8] sm:$0xff]
    %v700 = vld [vmem:[%s697 + $0x10] sm:$0xff]
    %v701 = vld [vmem:[%s697 + $0x18] sm:$0xff]
    %v702 = vld [vmem:[%s697 + $0x20] sm:$0xff]
    %v703 = vld [vmem:[%s697 + $0x28] sm:$0xff]
    %v704 = vld [vmem:[%s697 + $0x30] sm:$0xff]
    %v705 = vld [vmem:[%s697 + $0x38] sm:$0xff]
    %707 = vset.pattern.permute.xlu0 0
    %708 = vperm.xlu0 %707, %v698
    %v709 = vpop.permute.xlu0 %708
    %712 = vset.pattern.permute.xlu0 0
    %713 = vperm.xlu0 %712, %v699
    %v714 = vpop.permute.xlu0 %713
    %717 = vset.pattern.permute.xlu0 0
    %718 = vperm.xlu0 %717, %v700
    %v719 = vpop.permute.xlu0 %718
    %722 = vset.pattern.permute.xlu0 0
    %723 = vperm.xlu0 %722, %v701
    %v724 = vpop.permute.xlu0 %723
    %727 = vset.pattern.permute.xlu0 0
    %728 = vperm.xlu0 %727, %v702
    %v729 = vpop.permute.xlu0 %728
    %732 = vset.pattern.permute.xlu0 0
    %733 = vperm.xlu0 %732, %v703
    %v734 = vpop.permute.xlu0 %733
    %737 = vset.pattern.permute.xlu0 0
    %738 = vperm.xlu0 %737, %v704
    %v739 = vpop.permute.xlu0 %738
    %742 = vset.pattern.permute.xlu0 0
    %743 = vperm.xlu0 %742, %v705
    %v744 = vpop.permute.xlu0 %743
    %v747 = vsel %vm421, %v689, 0
    %v750 = vsel %vm421, %v690, 0
    %v753 = vsel %vm421, %v691, 0
    %v756 = vsel %vm421, %v692, 0
    %v759 = vsel %vm421, %v693, 0
    %v762 = vsel %vm421, %v694, 0
    %v765 = vsel %vm421, %v695, 0
    %v768 = vsel %vm421, %v696, 0
    %770 = vmatprep.subr.mxu0 0.0
    %771 = vmatpush1.msra.mxu0 0.0
    %772 = vmatprep.subr.mxu0 0.0
    %773 = vmatpush1.msra.mxu0 0.0
    %774 = vmatprep.subr.mxu0 0.0
    %775 = vmatpush1.msra.mxu0 0.0
    %776 = vmatprep.subr.mxu0 0.0
    %777 = vmatpush1.msra.mxu0 0.0
    %778 = vmatprep.subr.mxu0 0.0
    %779 = vmatpush1.msra.mxu0 0.0
    %780 = vmatprep.subr.mxu0 0.0
    %781 = vmatpush1.msra.mxu0 0.0
    %782 = vmatprep.subr.mxu0 0.0
    %783 = vmatpush1.msra.mxu0 0.0
    %784 = vmatprep.subr.mxu0 0.0
    %785 = vmatpush1.msra.mxu0 0.0
    %786 = vmatprep.subr.mxu0 0.0
    %787 = vmatpush1.msra.mxu0 %v685
    %788 = vmatprep.subr.mxu0 0.0
    %789 = vmatpush1.msra.mxu0 %v680
    %790 = vmatprep.subr.mxu0 0.0
    %791 = vmatpush1.msra.mxu0 %v675
    %792 = vmatprep.subr.mxu0 0.0
    %793 = vmatpush1.msra.mxu0 %v670
    %794 = vmatprep.subr.mxu0 0.0
    %795 = vmatpush1.msra.mxu0 %v665
    %796 = vmatprep.subr.mxu0 0.0
    %797 = vmatpush1.msra.mxu0 %v660
    %798 = vmatprep.subr.mxu0 0.0
    %799 = vmatpush1.msra.mxu0 %v655
    %800 = vmatprep.subr.mxu0 0.0
    %801 = vmatpush1.msra.mxu0 %v650
    %802 = vmatprep.subr.mxu0 0.0
    %803 = vmatpush2.msra.mxu0 0.0
    %804 = vmatprep.subr.mxu0 0.0
    %805 = vmatpush2.msra.mxu0 0.0
    %806 = vmatprep.subr.mxu0 0.0
    %807 = vmatpush2.msra.mxu0 0.0
    %808 = vmatprep.subr.mxu0 0.0
    %809 = vmatpush2.msra.mxu0 0.0
    %810 = vmatprep.subr.mxu0 0.0
    %811 = vmatpush2.msra.mxu0 0.0
    %812 = vmatprep.subr.mxu0 0.0
    %813 = vmatpush2.msra.mxu0 0.0
    %814 = vmatprep.subr.mxu0 0.0
    %815 = vmatpush2.msra.mxu0 0.0
    %816 = vmatprep.subr.mxu0 0.0
    %817 = vmatpush2.msra.mxu0 0.0
    %818 = vmatprep.subr.mxu0 0.0
    %819 = vmatpush2.msra.mxu0 0.0
    %820 = vmatprep.subr.mxu0 0.0
    %821 = vmatpush2.msra.mxu0 0.0
    %822 = vmatprep.subr.mxu0 0.0
    %823 = vmatpush2.msra.mxu0 0.0
    %824 = vmatprep.subr.mxu0 0.0
    %825 = vmatpush2.msra.mxu0 0.0
    %826 = vmatprep.subr.mxu0 0.0
    %827 = vmatpush2.msra.mxu0 0.0
    %828 = vmatprep.subr.mxu0 0.0
    %829 = vmatpush2.msra.mxu0 0.0
    %830 = vmatprep.subr.mxu0 0.0
    %831 = vmatpush2.msra.mxu0 0.0
    %832 = vmatprep.subr.mxu0 0.0
    %833 = vmatpush2.msra.mxu0 0.0
    %834 = vmatprep.mubr.f32.mxu0 0.0
    %835 = vmatmul.mubr.f32.gmra.mxu0 %v747
    %v836 = vpop.f32.mrf.mxu0
    %v837 = vadd.f32 %v709, %v836
    %v838 = vpop.f32.mrf.mxu0
    %839 = vmatprep.mubr.f32.mxu0 0.0
    %840 = vmatmul.mubr.f32.gmra.mxu0 %v750
    %v841 = vpop.f32.mrf.mxu0
    %v842 = vadd.f32 %v714, %v841
    %v843 = vpop.f32.mrf.mxu0
    %844 = vmatprep.mubr.f32.mxu0 0.0
    %845 = vmatmul.mubr.f32.gmra.mxu0 %v753
    %v846 = vpop.f32.mrf.mxu0
    %v847 = vadd.f32 %v719, %v846
    %v848 = vpop.f32.mrf.mxu0
    %849 = vmatprep.mubr.f32.mxu0 0.0
    %850 = vmatmul.mubr.f32.gmra.mxu0 %v756
    %v851 = vpop.f32.mrf.mxu0
    %v852 = vadd.f32 %v724, %v851
    %v853 = vpop.f32.mrf.mxu0
    %854 = vmatprep.mubr.f32.mxu0 0.0
    %855 = vmatmul.mubr.f32.gmra.mxu0 %v759
    %v856 = vpop.f32.mrf.mxu0
    %v857 = vadd.f32 %v729, %v856
    %v858 = vpop.f32.mrf.mxu0
    %859 = vmatprep.mubr.f32.mxu0 0.0
    %860 = vmatmul.mubr.f32.gmra.mxu0 %v762
    %v861 = vpop.f32.mrf.mxu0
    %v862 = vadd.f32 %v734, %v861
    %v863 = vpop.f32.mrf.mxu0
    %864 = vmatprep.mubr.f32.mxu0 0.0
    %865 = vmatmul.mubr.f32.gmra.mxu0 %v765
    %v866 = vpop.f32.mrf.mxu0
    %v867 = vadd.f32 %v739, %v866
    %v868 = vpop.f32.mrf.mxu0
    %869 = vmatprep.mubr.f32.mxu0 0.0
    %870 = vmatmul.mubr.f32.gmra.mxu0 %v768
    %v871 = vpop.f32.mrf.mxu0
    %v872 = vadd.f32 %v744, %v871
    %v873 = vpop.f32.mrf.mxu0
    %874 = vdwg.mxu0
    %v875 = vmax.f32 %v837, 0.0
    %v876 = vmax.f32 %v842, 0.0
    %v877 = vmax.f32 %v847, 0.0
    %v878 = vmax.f32 %v852, 0.0
    %v879 = vmax.f32 %v857, 0.0
    %v880 = vmax.f32 %v862, 0.0
    %v881 = vmax.f32 %v867, 0.0
    %v882 = vmax.f32 %v872, 0.0
    %v884 = vsel %vm235, %v875, 0
    %v887 = vsel %vm235, %v876, 0
    %v890 = vsel %vm235, %v877, 0
    %v893 = vsel %vm235, %v878, 0
    %v896 = vsel %vm235, %v879, 0
    %v899 = vsel %vm235, %v880, 0
    %v902 = vsel %vm235, %v881, 0
    %v905 = vsel %vm235, %v882, 0
    %907 = vmatprep.subr.mxu0 0.0
    %908 = vmatpush1.msra.mxu0 0.0
    %909 = vmatprep.subr.mxu0 0.0
    %910 = vmatpush1.msra.mxu0 0.0
    %911 = vmatprep.subr.mxu0 0.0
    %912 = vmatpush1.msra.mxu0 0.0
    %913 = vmatprep.subr.mxu0 0.0
    %914 = vmatpush1.msra.mxu0 0.0
    %915 = vmatprep.subr.mxu0 0.0
    %916 = vmatpush1.msra.mxu0 0.0
    %917 = vmatprep.subr.mxu0 0.0
    %918 = vmatpush1.msra.mxu0 0.0
    %919 = vmatprep.subr.mxu0 0.0
    %920 = vmatpush1.msra.mxu0 0.0
    %921 = vmatprep.subr.mxu0 0.0
    %922 = vmatpush1.msra.mxu0 0.0
    %923 = vmatprep.subr.mxu0 0.0
    %924 = vmatpush1.msra.mxu0 0.0
    %925 = vmatprep.subr.mxu0 0.0
    %926 = vmatpush1.msra.mxu0 0.0
    %927 = vmatprep.subr.mxu0 0.0
    %928 = vmatpush1.msra.mxu0 0.0
    %929 = vmatprep.subr.mxu0 0.0
    %930 = vmatpush1.msra.mxu0 0.0
    %931 = vmatprep.subr.mxu0 0.0
    %932 = vmatpush1.msra.mxu0 0.0
    %933 = vmatprep.subr.mxu0 0.0
    %934 = vmatpush1.msra.mxu0 0.0
    %935 = vmatprep.subr.mxu0 0.0
    %936 = vmatpush1.msra.mxu0 0.0
    %937 = vmatprep.subr.mxu0 0.0
    %938 = vmatpush1.msra.mxu0 %v43
    %939 = vmatprep.subr.mxu0 0.0
    %940 = vmatpush2.msra.mxu0 0.0
    %941 = vmatprep.subr.mxu0 0.0
    %942 = vmatpush2.msra.mxu0 0.0
    %943 = vmatprep.subr.mxu0 0.0
    %944 = vmatpush2.msra.mxu0 0.0
    %945 = vmatprep.subr.mxu0 0.0
    %946 = vmatpush2.msra.mxu0 0.0
    %947 = vmatprep.subr.mxu0 0.0
    %948 = vmatpush2.msra.mxu0 0.0
    %949 = vmatprep.subr.mxu0 0.0
    %950 = vmatpush2.msra.mxu0 0.0
    %951 = vmatprep.subr.mxu0 0.0
    %952 = vmatpush2.msra.mxu0 0.0
    %953 = vmatprep.subr.mxu0 0.0
    %954 = vmatpush2.msra.mxu0 0.0
    %955 = vmatprep.subr.mxu0 0.0
    %956 = vmatpush2.msra.mxu0 0.0
    %957 = vmatprep.subr.mxu0 0.0
    %958 = vmatpush2.msra.mxu0 0.0
    %959 = vmatprep.subr.mxu0 0.0
    %960 = vmatpush2.msra.mxu0 0.0
    %961 = vmatprep.subr.mxu0 0.0
    %962 = vmatpush2.msra.mxu0 0.0
    %963 = vmatprep.subr.mxu0 0.0
    %964 = vmatpush2.msra.mxu0 0.0
    %965 = vmatprep.subr.mxu0 0.0
    %966 = vmatpush2.msra.mxu0 0.0
    %967 = vmatprep.subr.mxu0 0.0
    %968 = vmatpush2.msra.mxu0 0.0
    %969 = vmatprep.subr.mxu0 0.0
    %970 = vmatpush2.msra.mxu0 0.0
    %971 = vmatprep.mubr.f32.mxu0 0.0
    %972 = vmatmul.mubr.f32.gmra.mxu0 %v884
    %v973 = vpop.f32.mrf.mxu0
    %v974 = vadd.f32 0.0, %v973
    %v975 = vpop.f32.mrf.mxu0
    %976 = vmatprep.mubr.f32.mxu0 0.0
    %977 = vmatmul.mubr.f32.gmra.mxu0 %v887
    %v978 = vpop.f32.mrf.mxu0
    %v979 = vadd.f32 0.0, %v978
    %v980 = vpop.f32.mrf.mxu0
    %981 = vmatprep.mubr.f32.mxu0 0.0
    %982 = vmatmul.mubr.f32.gmra.mxu0 %v890
    %v983 = vpop.f32.mrf.mxu0
    %v984 = vadd.f32 0.0, %v983
    %v985 = vpop.f32.mrf.mxu0
    %986 = vmatprep.mubr.f32.mxu0 0.0
    %987 = vmatmul.mubr.f32.gmra.mxu0 %v893
    %v988 = vpop.f32.mrf.mxu0
    %v989 = vadd.f32 0.0, %v988
    %v990 = vpop.f32.mrf.mxu0
    %991 = vmatprep.mubr.f32.mxu0 0.0
    %992 = vmatmul.mubr.f32.gmra.mxu0 %v896
    %v993 = vpop.f32.mrf.mxu0
    %v994 = vadd.f32 0.0, %v993
    %v995 = vpop.f32.mrf.mxu0
    %996 = vmatprep.mubr.f32.mxu0 0.0
    %997 = vmatmul.mubr.f32.gmra.mxu0 %v899
    %v998 = vpop.f32.mrf.mxu0
    %v999 = vadd.f32 0.0, %v998
    %v1000 = vpop.f32.mrf.mxu0
    %1001 = vmatprep.mubr.f32.mxu0 0.0
    %1002 = vmatmul.mubr.f32.gmra.mxu0 %v902
    %v1003 = vpop.f32.mrf.mxu0
    %v1004 = vadd.f32 0.0, %v1003
    %v1005 = vpop.f32.mrf.mxu0
    %1006 = vmatprep.mubr.f32.mxu0 0.0
    %1007 = vmatmul.mubr.f32.gmra.mxu0 %v905
    %v1008 = vpop.f32.mrf.mxu0
    %v1009 = vadd.f32 0.0, %v1008
    %v1010 = vpop.f32.mrf.mxu0
    %1011 = vdwg.mxu0
    %s1012 = scalar_lea.vmem %s4, 128
    %v1013 = vld [vmem:[%s1012] sm:$0xff]
    %v1014 = vld [vmem:[%s1012 + $0x8] sm:$0xff]
    %v1015 = vld [vmem:[%s1012 + $0x10] sm:$0xff]
    %v1016 = vld [vmem:[%s1012 + $0x18] sm:$0xff]
    %v1017 = vld [vmem:[%s1012 + $0x20] sm:$0xff]
    %v1018 = vld [vmem:[%s1012 + $0x28] sm:$0xff]
    %v1019 = vld [vmem:[%s1012 + $0x30] sm:$0xff]
    %v1020 = vld [vmem:[%s1012 + $0x38] sm:$0xff]
    %s1021 = scalar_lea.vmem %s5, 128
    %v1022 = vld [vmem:[%s1021] sm:$0xff]
    %v1023 = vld [vmem:[%s1021 + $0x8] sm:$0xff]
    %v1024 = vld [vmem:[%s1021 + $0x10] sm:$0xff]
    %v1025 = vld [vmem:[%s1021 + $0x18] sm:$0xff]
    %v1026 = vld [vmem:[%s1021 + $0x20] sm:$0xff]
    %v1027 = vld [vmem:[%s1021 + $0x28] sm:$0xff]
    %v1028 = vld [vmem:[%s1021 + $0x30] sm:$0xff]
    %v1029 = vld [vmem:[%s1021 + $0x38] sm:$0xff]
    %1031 = vset.pattern.permute.xlu0 0
    %1032 = vperm.xlu0 %1031, %v1022
    %v1033 = vpop.permute.xlu0 %1032
    %1036 = vset.pattern.permute.xlu0 0
    %1037 = vperm.xlu0 %1036, %v1023
    %v1038 = vpop.permute.xlu0 %1037
    %1041 = vset.pattern.permute.xlu0 0
    %1042 = vperm.xlu0 %1041, %v1024
    %v1043 = vpop.permute.xlu0 %1042
    %1046 = vset.pattern.permute.xlu0 0
    %1047 = vperm.xlu0 %1046, %v1025
    %v1048 = vpop.permute.xlu0 %1047
    %1051 = vset.pattern.permute.xlu0 0
    %1052 = vperm.xlu0 %1051, %v1026
    %v1053 = vpop.permute.xlu0 %1052
    %1056 = vset.pattern.permute.xlu0 0
    %1057 = vperm.xlu0 %1056, %v1027
    %v1058 = vpop.permute.xlu0 %1057
    %1061 = vset.pattern.permute.xlu0 0
    %1062 = vperm.xlu0 %1061, %v1028
    %v1063 = vpop.permute.xlu0 %1062
    %1066 = vset.pattern.permute.xlu0 0
    %1067 = vperm.xlu0 %1066, %v1029
    %v1068 = vpop.permute.xlu0 %1067
    %v1071 = vsel %vm421, %v1013, 0
    %v1074 = vsel %vm421, %v1014, 0
    %v1077 = vsel %vm421, %v1015, 0
    %v1080 = vsel %vm421, %v1016, 0
    %v1083 = vsel %vm421, %v1017, 0
    %v1086 = vsel %vm421, %v1018, 0
    %v1089 = vsel %vm421, %v1019, 0
    %v1092 = vsel %vm421, %v1020, 0
    %1094 = vmatprep.subr.mxu0 0.0
    %1095 = vmatpush1.msra.mxu0 0.0
    %1096 = vmatprep.subr.mxu0 0.0
    %1097 = vmatpush1.msra.mxu0 0.0
    %1098 = vmatprep.subr.mxu0 0.0
    %1099 = vmatpush1.msra.mxu0 0.0
    %1100 = vmatprep.subr.mxu0 0.0
    %1101 = vmatpush1.msra.mxu0 0.0
    %1102 = vmatprep.subr.mxu0 0.0
    %1103 = vmatpush1.msra.mxu0 0.0
    %1104 = vmatprep.subr.mxu0 0.0
    %1105 = vmatpush1.msra.mxu0 0.0
    %1106 = vmatprep.subr.mxu0 0.0
    %1107 = vmatpush1.msra.mxu0 0.0
    %1108 = vmatprep.subr.mxu0 0.0
    %1109 = vmatpush1.msra.mxu0 0.0
    %1110 = vmatprep.subr.mxu0 0.0
    %1111 = vmatpush1.msra.mxu0 %v1009
    %1112 = vmatprep.subr.mxu0 0.0
    %1113 = vmatpush1.msra.mxu0 %v1004
    %1114 = vmatprep.subr.mxu0 0.0
    %1115 = vmatpush1.msra.mxu0 %v999
    %1116 = vmatprep.subr.mxu0 0.0
    %1117 = vmatpush1.msra.mxu0 %v994
    %1118 = vmatprep.subr.mxu0 0.0
    %1119 = vmatpush1.msra.mxu0 %v989
    %1120 = vmatprep.subr.mxu0 0.0
    %1121 = vmatpush1.msra.mxu0 %v984
    %1122 = vmatprep.subr.mxu0 0.0
    %1123 = vmatpush1.msra.mxu0 %v979
    %1124 = vmatprep.subr.mxu0 0.0
    %1125 = vmatpush1.msra.mxu0 %v974
    %1126 = vmatprep.subr.mxu0 0.0
    %1127 = vmatpush2.msra.mxu0 0.0
    %1128 = vmatprep.subr.mxu0 0.0
    %1129 = vmatpush2.msra.mxu0 0.0
    %1130 = vmatprep.subr.mxu0 0.0
    %1131 = vmatpush2.msra.mxu0 0.0
    %1132 = vmatprep.subr.mxu0 0.0
    %1133 = vmatpush2.msra.mxu0 0.0
    %1134 = vmatprep.subr.mxu0 0.0
    %1135 = vmatpush2.msra.mxu0 0.0
    %1136 = vmatprep.subr.mxu0 0.0
    %1137 = vmatpush2.msra.mxu0 0.0
    %1138 = vmatprep.subr.mxu0 0.0
    %1139 = vmatpush2.msra.mxu0 0.0
    %1140 = vmatprep.subr.mxu0 0.0
    %1141 = vmatpush2.msra.mxu0 0.0
    %1142 = vmatprep.subr.mxu0 0.0
    %1143 = vmatpush2.msra.mxu0 0.0
    %1144 = vmatprep.subr.mxu0 0.0
    %1145 = vmatpush2.msra.mxu0 0.0
    %1146 = vmatprep.subr.mxu0 0.0
    %1147 = vmatpush2.msra.mxu0 0.0
    %1148 = vmatprep.subr.mxu0 0.0
    %1149 = vmatpush2.msra.mxu0 0.0
    %1150 = vmatprep.subr.mxu0 0.0
    %1151 = vmatpush2.msra.mxu0 0.0
    %1152 = vmatprep.subr.mxu0 0.0
    %1153 = vmatpush2.msra.mxu0 0.0
    %1154 = vmatprep.subr.mxu0 0.0
    %1155 = vmatpush2.msra.mxu0 0.0
    %1156 = vmatprep.subr.mxu0 0.0
    %1157 = vmatpush2.msra.mxu0 0.0
    %1158 = vmatprep.mubr.f32.mxu0 0.0
    %1159 = vmatmul.mubr.f32.gmra.mxu0 %v1071
    %v1160 = vpop.f32.mrf.mxu0
    %v1161 = vadd.f32 %v1033, %v1160
    %v1162 = vpop.f32.mrf.mxu0
    %1163 = vmatprep.mubr.f32.mxu0 0.0
    %1164 = vmatmul.mubr.f32.gmra.mxu0 %v1074
    %v1165 = vpop.f32.mrf.mxu0
    %v1166 = vadd.f32 %v1038, %v1165
    %v1167 = vpop.f32.mrf.mxu0
    %1168 = vmatprep.mubr.f32.mxu0 0.0
    %1169 = vmatmul.mubr.f32.gmra.mxu0 %v1077
    %v1170 = vpop.f32.mrf.mxu0
    %v1171 = vadd.f32 %v1043, %v1170
    %v1172 = vpop.f32.mrf.mxu0
    %1173 = vmatprep.mubr.f32.mxu0 0.0
    %1174 = vmatmul.mubr.f32.gmra.mxu0 %v1080
    %v1175 = vpop.f32.mrf.mxu0
    %v1176 = vadd.f32 %v1048, %v1175
    %v1177 = vpop.f32.mrf.mxu0
    %1178 = vmatprep.mubr.f32.mxu0 0.0
    %1179 = vmatmul.mubr.f32.gmra.mxu0 %v1083
    %v1180 = vpop.f32.mrf.mxu0
    %v1181 = vadd.f32 %v1053, %v1180
    %v1182 = vpop.f32.mrf.mxu0
    %1183 = vmatprep.mubr.f32.mxu0 0.0
    %1184 = vmatmul.mubr.f32.gmra.mxu0 %v1086
    %v1185 = vpop.f32.mrf.mxu0
    %v1186 = vadd.f32 %v1058, %v1185
    %v1187 = vpop.f32.mrf.mxu0
    %1188 = vmatprep.mubr.f32.mxu0 0.0
    %1189 = vmatmul.mubr.f32.gmra.mxu0 %v1089
    %v1190 = vpop.f32.mrf.mxu0
    %v1191 = vadd.f32 %v1063, %v1190
    %v1192 = vpop.f32.mrf.mxu0
    %1193 = vmatprep.mubr.f32.mxu0 0.0
    %1194 = vmatmul.mubr.f32.gmra.mxu0 %v1092
    %v1195 = vpop.f32.mrf.mxu0
    %v1196 = vadd.f32 %v1068, %v1195
    %v1197 = vpop.f32.mrf.mxu0
    %1198 = vdwg.mxu0
    %v1199 = vmax.f32 %v1161, 0.0
    %v1200 = vmax.f32 %v1166, 0.0
    %v1201 = vmax.f32 %v1171, 0.0
    %v1202 = vmax.f32 %v1176, 0.0
    %v1203 = vmax.f32 %v1181, 0.0
    %v1204 = vmax.f32 %v1186, 0.0
    %v1205 = vmax.f32 %v1191, 0.0
    %v1206 = vmax.f32 %v1196, 0.0
    %v1207 = vld [vmem:[%s6] sm:$0xff]
    %v1208 = vld [vmem:[%s6 + $0x8] sm:$0xff]
    %v1209 = vld [vmem:[%s6 + $0x10] sm:$0xff]
    %v1210 = vld [vmem:[%s6 + $0x18] sm:$0xff]
    %vm1211 = vcmask 261120
    %v1213 = vsel %vm1211, %v1207, 0
    %v1216 = vsel %vm1211, %v1208, 0
    %v1219 = vsel %vm1211, %v1209, 0
    %v1222 = vsel %vm1211, %v1210, 0
    %1224 = vmatprep.subr.mxu0 0.0
    %1225 = vmatpush1.msra.mxu0 0.0
    %1226 = vmatprep.subr.mxu0 0.0
    %1227 = vmatpush1.msra.mxu0 0.0
    %1228 = vmatprep.subr.mxu0 0.0
    %1229 = vmatpush1.msra.mxu0 0.0
    %1230 = vmatprep.subr.mxu0 0.0
    %1231 = vmatpush1.msra.mxu0 0.0
    %1232 = vmatprep.subr.mxu0 0.0
    %1233 = vmatpush1.msra.mxu0 0.0
    %1234 = vmatprep.subr.mxu0 0.0
    %1235 = vmatpush1.msra.mxu0 0.0
    %1236 = vmatprep.subr.mxu0 0.0
    %1237 = vmatpush1.msra.mxu0 0.0
    %1238 = vmatprep.subr.mxu0 0.0
    %1239 = vmatpush1.msra.mxu0 0.0
    %1240 = vmatprep.subr.mxu0 0.0
    %1241 = vmatpush1.msra.mxu0 0.0
    %1242 = vmatprep.subr.mxu0 0.0
    %1243 = vmatpush1.msra.mxu0 0.0
    %1244 = vmatprep.subr.mxu0 0.0
    %1245 = vmatpush1.msra.mxu0 0.0
    %1246 = vmatprep.subr.mxu0 0.0
    %1247 = vmatpush1.msra.mxu0 0.0
    %1248 = vmatprep.subr.mxu0 0.0
    %1249 = vmatpush1.msra.mxu0 %v1202
    %1250 = vmatprep.subr.mxu0 0.0
    %1251 = vmatpush1.msra.mxu0 %v1201
    %1252 = vmatprep.subr.mxu0 0.0
    %1253 = vmatpush1.msra.mxu0 %v1200
    %1254 = vmatprep.subr.mxu0 0.0
    %1255 = vmatpush1.msra.mxu0 %v1199
    %1256 = vmatprep.subr.mxu0 0.0
    %1257 = vmatpush2.msra.mxu0 0.0
    %1258 = vmatprep.subr.mxu0 0.0
    %1259 = vmatpush2.msra.mxu0 0.0
    %1260 = vmatprep.subr.mxu0 0.0
    %1261 = vmatpush2.msra.mxu0 0.0
    %1262 = vmatprep.subr.mxu0 0.0
    %1263 = vmatpush2.msra.mxu0 0.0
    %1264 = vmatprep.subr.mxu0 0.0
    %1265 = vmatpush2.msra.mxu0 0.0
    %1266 = vmatprep.subr.mxu0 0.0
    %1267 = vmatpush2.msra.mxu0 0.0
    %1268 = vmatprep.subr.mxu0 0.0
    %1269 = vmatpush2.msra.mxu0 0.0
    %1270 = vmatprep.subr.mxu0 0.0
    %1271 = vmatpush2.msra.mxu0 0.0
    %1272 = vmatprep.subr.mxu0 0.0
    %1273 = vmatpush2.msra.mxu0 0.0
    %1274 = vmatprep.subr.mxu0 0.0
    %1275 = vmatpush2.msra.mxu0 0.0
    %1276 = vmatprep.subr.mxu0 0.0
    %1277 = vmatpush2.msra.mxu0 0.0
    %1278 = vmatprep.subr.mxu0 0.0
    %1279 = vmatpush2.msra.mxu0 0.0
    %1280 = vmatprep.subr.mxu0 0.0
    %1281 = vmatpush2.msra.mxu0 0.0
    %1282 = vmatprep.subr.mxu0 0.0
    %1283 = vmatpush2.msra.mxu0 0.0
    %1284 = vmatprep.subr.mxu0 0.0
    %1285 = vmatpush2.msra.mxu0 0.0
    %1286 = vmatprep.subr.mxu0 0.0
    %1287 = vmatpush2.msra.mxu0 0.0
    %1288 = vmatprep.mubr.f32.mxu0 0.0
    %1289 = vmatmul.mubr.f32.gmra.mxu0 %v1213
    %v1290 = vpop.f32.mrf.mxu0
    %v1291 = vadd.f32 0.0, %v1290
    %v1292 = vpop.f32.mrf.mxu0
    %1293 = vmatprep.mubr.f32.mxu0 0.0
    %1294 = vmatmul.mubr.f32.gmra.mxu0 %v1216
    %v1295 = vpop.f32.mrf.mxu0
    %v1296 = vadd.f32 0.0, %v1295
    %v1297 = vpop.f32.mrf.mxu0
    %1298 = vmatprep.mubr.f32.mxu0 0.0
    %1299 = vmatmul.mubr.f32.gmra.mxu0 %v1219
    %v1300 = vpop.f32.mrf.mxu0
    %v1301 = vadd.f32 0.0, %v1300
    %v1302 = vpop.f32.mrf.mxu0
    %1303 = vmatprep.mubr.f32.mxu0 0.0
    %1304 = vmatmul.mubr.f32.gmra.mxu0 %v1222
    %v1305 = vpop.f32.mrf.mxu0
    %v1306 = vadd.f32 0.0, %v1305
    %v1307 = vpop.f32.mrf.mxu0
    %1308 = vdwg.mxu0
    %1309 = vst.msk [vmem:[%s11] sm:$0xff] %vm235, %v1291
    %1310 = vst.msk [vmem:[%s11 + $0x8] sm:$0xff] %vm235, %v1296
    %1311 = vst.msk [vmem:[%s11 + $0x10] sm:$0xff] %vm235, %v1301
    %1312 = vst.msk [vmem:[%s11 + $0x18] sm:$0xff] %vm235, %v1306
    %v1313 = vld [vmem:[%s7] sm:$0xff]
    %v1314 = vld [vmem:[%s7 + $0x8] sm:$0xff]
    %v1315 = vld [vmem:[%s7 + $0x10] sm:$0xff]
    %v1316 = vld [vmem:[%s7 + $0x18] sm:$0xff]
    %v1317 = vld [vmem:[%s8] sm:$0xff]
    %v1318 = vld [vmem:[%s8 + $0x8] sm:$0xff]
    %v1319 = vld [vmem:[%s8 + $0x10] sm:$0xff]
    %v1320 = vld [vmem:[%s8 + $0x18] sm:$0xff]
    %1322 = vset.pattern.permute.xlu0 0
    %1323 = vperm.xlu0 %1322, %v1317
    %v1324 = vpop.permute.xlu0 %1323
    %1327 = vset.pattern.permute.xlu0 0
    %1328 = vperm.xlu0 %1327, %v1318
    %v1329 = vpop.permute.xlu0 %1328
    %1332 = vset.pattern.permute.xlu0 0
    %1333 = vperm.xlu0 %1332, %v1319
    %v1334 = vpop.permute.xlu0 %1333
    %1337 = vset.pattern.permute.xlu0 0
    %1338 = vperm.xlu0 %1337, %v1320
    %v1339 = vpop.permute.xlu0 %1338
    %v1342 = vsel %vm1211, %v1313, 0
    %v1345 = vsel %vm1211, %v1314, 0
    %v1348 = vsel %vm1211, %v1315, 0
    %v1351 = vsel %vm1211, %v1316, 0
    %1353 = vmatprep.subr.mxu0 0.0
    %1354 = vmatpush1.msra.mxu0 0.0
    %1355 = vmatprep.subr.mxu0 0.0
    %1356 = vmatpush1.msra.mxu0 0.0
    %1357 = vmatprep.subr.mxu0 0.0
    %1358 = vmatpush1.msra.mxu0 0.0
    %1359 = vmatprep.subr.mxu0 0.0
    %1360 = vmatpush1.msra.mxu0 0.0
    %1361 = vmatprep.subr.mxu0 0.0
    %1362 = vmatpush1.msra.mxu0 0.0
    %1363 = vmatprep.subr.mxu0 0.0
    %1364 = vmatpush1.msra.mxu0 0.0
    %1365 = vmatprep.subr.mxu0 0.0
    %1366 = vmatpush1.msra.mxu0 0.0
    %1367 = vmatprep.subr.mxu0 0.0
    %1368 = vmatpush1.msra.mxu0 0.0
    %1369 = vmatprep.subr.mxu0 0.0
    %1370 = vmatpush1.msra.mxu0 0.0
    %1371 = vmatprep.subr.mxu0 0.0
    %1372 = vmatpush1.msra.mxu0 0.0
    %1373 = vmatprep.subr.mxu0 0.0
    %1374 = vmatpush1.msra.mxu0 0.0
    %1375 = vmatprep.subr.mxu0 0.0
    %1376 = vmatpush1.msra.mxu0 0.0
    %1377 = vmatprep.subr.mxu0 0.0
    %1378 = vmatpush1.msra.mxu0 %v1206
    %1379 = vmatprep.subr.mxu0 0.0
    %1380 = vmatpush1.msra.mxu0 %v1205
    %1381 = vmatprep.subr.mxu0 0.0
    %1382 = vmatpush1.msra.mxu0 %v1204
    %1383 = vmatprep.subr.mxu0 0.0
    %1384 = vmatpush1.msra.mxu0 %v1203
    %1385 = vmatprep.subr.mxu0 0.0
    %1386 = vmatpush2.msra.mxu0 0.0
    %1387 = vmatprep.subr.mxu0 0.0
    %1388 = vmatpush2.msra.mxu0 0.0
    %1389 = vmatprep.subr.mxu0 0.0
    %1390 = vmatpush2.msra.mxu0 0.0
    %1391 = vmatprep.subr.mxu0 0.0
    %1392 = vmatpush2.msra.mxu0 0.0
    %1393 = vmatprep.subr.mxu0 0.0
    %1394 = vmatpush2.msra.mxu0 0.0
    %1395 = vmatprep.subr.mxu0 0.0
    %1396 = vmatpush2.msra.mxu0 0.0
    %1397 = vmatprep.subr.mxu0 0.0
    %1398 = vmatpush2.msra.mxu0 0.0
    %1399 = vmatprep.subr.mxu0 0.0
    %1400 = vmatpush2.msra.mxu0 0.0
    %1401 = vmatprep.subr.mxu0 0.0
    %1402 = vmatpush2.msra.mxu0 0.0
    %1403 = vmatprep.subr.mxu0 0.0
    %1404 = vmatpush2.msra.mxu0 0.0
    %1405 = vmatprep.subr.mxu0 0.0
    %1406 = vmatpush2.msra.mxu0 0.0
    %1407 = vmatprep.subr.mxu0 0.0
    %1408 = vmatpush2.msra.mxu0 0.0
    %1409 = vmatprep.subr.mxu0 0.0
    %1410 = vmatpush2.msra.mxu0 0.0
    %1411 = vmatprep.subr.mxu0 0.0
    %1412 = vmatpush2.msra.mxu0 0.0
    %1413 = vmatprep.subr.mxu0 0.0
    %1414 = vmatpush2.msra.mxu0 0.0
    %1415 = vmatprep.subr.mxu0 0.0
    %1416 = vmatpush2.msra.mxu0 0.0
    %1417 = vmatprep.mubr.f32.mxu0 0.0
    %1418 = vmatmul.mubr.f32.gmra.mxu0 %v1342
    %v1419 = vpop.f32.mrf.mxu0
    %v1420 = vadd.f32 %v1324, %v1419
    %v1421 = vpop.f32.mrf.mxu0
    %1422 = vmatprep.mubr.f32.mxu0 0.0
    %1423 = vmatmul.mubr.f32.gmra.mxu0 %v1345
    %v1424 = vpop.f32.mrf.mxu0
    %v1425 = vadd.f32 %v1329, %v1424
    %v1426 = vpop.f32.mrf.mxu0
    %1427 = vmatprep.mubr.f32.mxu0 0.0
    %1428 = vmatmul.mubr.f32.gmra.mxu0 %v1348
    %v1429 = vpop.f32.mrf.mxu0
    %v1430 = vadd.f32 %v1334, %v1429
    %v1431 = vpop.f32.mrf.mxu0
    %1432 = vmatprep.mubr.f32.mxu0 0.0
    %1433 = vmatmul.mubr.f32.gmra.mxu0 %v1351
    %v1434 = vpop.f32.mrf.mxu0
    %v1435 = vadd.f32 %v1339, %v1434
    %v1436 = vpop.f32.mrf.mxu0
    %1437 = vdwg.mxu0
    %v1438 = vmax.f32 %v1420, 0.0
    %v1439 = vmax.f32 %v1425, 0.0
    %v1440 = vmax.f32 %v1430, 0.0
    %v1441 = vmax.f32 %v1435, 0.0
    %v1442 = vld [vmem:[%s9] sm:$0xff]
    %v1443 = vld [vmem:[%s9 + $0x8] sm:$0xff]
    %v1444 = vld [vmem:[%s9 + $0x10] sm:$0xff]
    %v1445 = vld [vmem:[%s9 + $0x18] sm:$0xff]
    %1447 = vset.pattern.permute.xlu0 0
    %1448 = vperm.xlu0 %1447, %v1442
    %v1449 = vpop.permute.xlu0 %1448
    %1452 = vset.pattern.permute.xlu0 0
    %1453 = vperm.xlu0 %1452, %v1443
    %v1454 = vpop.permute.xlu0 %1453
    %1457 = vset.pattern.permute.xlu0 0
    %1458 = vperm.xlu0 %1457, %v1444
    %v1459 = vpop.permute.xlu0 %1458
    %1462 = vset.pattern.permute.xlu0 0
    %1463 = vperm.xlu0 %1462, %v1445
    %v1464 = vpop.permute.xlu0 %1463
    %v1466 = vmul.f32 %v1438, %v1449
    %v1467 = vmul.f32 %v1439, %v1454
    %v1468 = vmul.f32 %v1440, %v1459
    %v1469 = vmul.f32 %v1441, %v1464
    %v1470 = vsel %vm235, %v1466, 0.0
    %v1471 = vsel %vm235, %v1467, 0.0
    %v1472 = vadd.f32 %v1470, %v1471
    %v1473 = vsel %vm235, %v1468, 0.0
    %v1474 = vadd.f32 %v1472, %v1473
    %v1475 = vsel %vm235, %v1469, 0.0
    %v1476 = vadd.f32 %v1474, %v1475
    %v1477 = vrot.slane %v1476, 4
    %v1478 = vadd.f32 %v1476, %v1477
    %v1479 = vrot.slane %v1478, 2
    %v1480 = vadd.f32 %v1478, %v1479
    %v1481 = vrot.slane %v1480, 1
    %v1482 = vadd.f32 %v1480, %v1481
    %v1483 = vld [vmem:[#allocation2] sm:$0x1]
    %1485 = vset.pattern.permute.xlu0 0
    %1486 = vperm.xlu0 %1485, %v1483
    %v1487 = vpop.permute.xlu0 %1486
    %v1489 = vlaneseq
    %v1490 = vshrl.u32 %v1489, 7
    %v1491 = vsub.s32 0, %v1490
    %v1492 = vrot.slane %v1487, %v1491
    %v1493 = vadd.f32 %v1482, %v1492
    %vm1494 = vcmask 57344
    %1495 = vst.msk [vmem:[#allocation3] sm:$0x1] %vm1494, %v1493
    // Predicated region
    $region46: #{tpu_custom_call.1} parent=1 // pred_check
      _
    $region47: #{tpu_custom_call.1} parent=1 // pred_check_branch
      %1497 = sbr.rel (0) target = $region49
    $region48: #{tpu_custom_call.1} parent=1 // pred_region
      _
    $region49: #{tpu_custom_call.1} parent=1 // pred_fallthru
      _
    // Predicated region
    $region50: #{tpu_custom_call.1} parent=1 // pred_check
      _
    $region51: #{tpu_custom_call.1} parent=1 // pred_check_branch
      %1499 = sbr.rel (0) target = $region53
    $region52: #{tpu_custom_call.1} parent=1 // pred_region
      %s1501 = ssub.s32 16, 16
      %1502 = vsyncadd [#allocation4], %s1501
      %s1504 = sshll.u32 [#allocation3], 4
      %s1505 = int_to_ptr.vmem [resolvable:$true] %s1504
      %1507 = dma.vmem_to_hbm [thread:$0]  %s1505, 16, %s12, [#allocation4]
    $region53: #{tpu_custom_call.1} parent=1 // pred_fallthru
      _
    // Predicated region
    $region54: #{tpu_custom_call.1} parent=1 // pred_check
      _
    $region55: #{tpu_custom_call.1} parent=1 // pred_check_branch
      %1509 = sbr.rel (0) target = $region57
    $region56: #{tpu_custom_call.1} parent=1 // pred_region
      _
    $region57: #{tpu_custom_call.1} parent=1 // pred_fallthru
      _
    // Predicated region
    $region58: #{tpu_custom_call.1} parent=1 // pred_check
      _
    $region59: #{tpu_custom_call.1} parent=1 // pred_check_branch
      %1511 = sbr.rel (0) target = $region61
    $region60: #{tpu_custom_call.1} parent=1 // pred_region
      %1512 = dma.done [#allocation4], 16
    $region61: #{tpu_custom_call.1} parent=1 // pred_fallthru
      _
    %1513 = vsyncpa [#allocation4], 1

</llo_original>
